<compile_context>
chip_gen: v7x
topology: tpu7x:2x2x1
jax: 0.10.0
libtpu: 0.0.40
codegen_flags: <defaults>
</compile_context>

<pallas_src>
import math

import jax
import jax.numpy as jnp
from jax import lax
from jax.experimental import pallas as pl
from jax.experimental.pallas import tpu as pltpu

# ---- static config ----
B = 2        # batch
S = 8        # sequence length
D = 32       # d_model
H = 4        # attention heads
DH = D // H  # head dim
DFF = 64     # feed-forward hidden
EPS = 1e-5   # nn.LayerNorm default eps
BS = B * S


def encoder_layer_kernel(x_ref, mask_ref, w_attn_ref, b_attn_ref,
                         w1_ref, b1_ref, w2_ref, misc_ref, out_ref):
    f32 = jnp.float32
    x = x_ref[...].astype(f32)              # (B, S, D)
    xf = x.reshape(BS, D)                   # (B*S, D)
    mask = mask_ref[...]                    # (B, S, S), 1 = attend, 0 = masked

    w_attn = w_attn_ref[...]                # (D, 4D) = [Wq | Wk | Wv | Wo]
    b_attn = b_attn_ref[...]                # (1, 4D) = [bq | bk | bv | bo]

    # ---- fused QKV projection: one MXU matmul for all batches/heads ----
    qkv = jnp.dot(xf, w_attn[:, :3 * D],
                  preferred_element_type=f32) + b_attn[:, :3 * D]   # (B*S, 3D)
    q = qkv[:, 0 * D:1 * D].reshape(B, S, D)
    k = qkv[:, 1 * D:2 * D].reshape(B, S, D)
    v = qkv[:, 2 * D:3 * D].reshape(B, S, D)
    wo = w_attn[:, 3 * D:]                  # (D, D)
    bo = b_attn[:, 3 * D:]                  # (1, D)

    scale = f32(1.0 / math.sqrt(DH))

    # ---- multi-head attention: batched over B, accumulated through Wo ----
    acc = jnp.zeros((BS, D), f32)
    for h in range(H):                      # static unroll over heads
        sl = slice(h * DH, (h + 1) * DH)
        qh, kh, vh = q[:, :, sl], k[:, :, sl], v[:, :, sl]           # (B, S, DH)
        s = jnp.einsum("bqd,bkd->bqk", qh, kh,
                       preferred_element_type=f32) * scale           # (B, S, S)
        s = jnp.where(mask > 0, s, f32(-1e9))
        s = s - jnp.max(s, axis=-1, keepdims=True)
        p = jnp.exp(s)
        p = p * pl.reciprocal(jnp.sum(p, axis=-1, keepdims=True), approx=False)
        pv = jnp.einsum("bqk,bkd->bqd", p, vh,
                        preferred_element_type=f32)                  # (B, S, DH)
        acc = acc + jnp.dot(pv.reshape(BS, DH), wo[sl, :],
                            preferred_element_type=f32)              # (B*S, D)
    attn = acc + bo

    # packed small params: rows = [b2, ln1_g, ln1_b, ln2_g, ln2_b]
    b2 = misc_ref[0:1, :]
    ln1_g, ln1_b = misc_ref[1:2, :], misc_ref[2:3, :]
    ln2_g, ln2_b = misc_ref[3:4, :], misc_ref[4:5, :]

    # ---- residual + LayerNorm 1 (post-norm, dropout = 0) ----
    h1 = xf + attn
    mu1 = jnp.mean(h1, axis=-1, keepdims=True)
    d1 = h1 - mu1
    var1 = jnp.mean(d1 * d1, axis=-1, keepdims=True)
    h1n = d1 * lax.rsqrt(var1 + EPS) * ln1_g + ln1_b

    # ---- feed-forward ----
    ff = jnp.dot(h1n, w1_ref[...], preferred_element_type=f32) + b1_ref[...]
    ff = jnp.maximum(ff, 0.0)
    ff = jnp.dot(ff, w2_ref[...], preferred_element_type=f32) + b2

    # ---- residual + LayerNorm 2 ----
    h2 = h1n + ff
    mu2 = jnp.mean(h2, axis=-1, keepdims=True)
    d2 = h2 - mu2
    var2 = jnp.mean(d2 * d2, axis=-1, keepdims=True)
    out = d2 * lax.rsqrt(var2 + EPS) * ln2_g + ln2_b

    out_ref[...] = out.reshape(B, S, D).astype(out_ref.dtype)


def encoder_layer(x, mask, params):
    (wq, bq, wk, bk, wv, bv, wo, bo,
     ln1_g, ln1_b, w1, b1, w2, b2, ln2_g, ln2_b) = params

    # Pack 18 tiny parameter tensors into a few lane-dense slabs (wrapper-side,
    # done once per call; order must match the static slices in the kernel).
    w_attn = jnp.concatenate([wq, wk, wv, wo], axis=1)                 # (D, 4D) = (32, 128)
    b_attn = jnp.concatenate([bq, bk, bv, bo], axis=1)                 # (1, 4D)
    misc = jnp.concatenate([b2, ln1_g, ln1_b, ln2_g, ln2_b], axis=0)   # (5, D)

    def full(shape):
        return pl.BlockSpec(shape, lambda i: (0,) * len(shape))

    return pl.pallas_call(
        encoder_layer_kernel,
        out_shape=jax.ShapeDtypeStruct((B, S, D), jnp.float32),
        grid=(1,),                               # single step: whole batch in VMEM (<100 KB)
        in_specs=[
            full((B, S, D)),      # x
            full((B, S, S)),      # mask
            full((D, 4 * D)),     # [Wq|Wk|Wv|Wo]
            full((1, 4 * D)),     # [bq|bk|bv|bo]
            full((D, DFF)),       # W1
            full((1, DFF)),       # b1
            full((DFF, D)),       # W2
            full((5, D)),         # [b2; ln1_g; ln1_b; ln2_g; ln2_b]
        ],
        out_specs=full((B, S, D)),
        compiler_params=pltpu.CompilerParams(
            dimension_semantics=("arbitrary",)),
    )(x, mask.astype(jnp.float32), w_attn, b_attn, w1, b1, w2, misc)


def reference(x, mask, params):
    """Pure-JAX reference of the same forward pass."""
    (wq, bq, wk, bk, wv, bv, wo, bo,
     ln1_g, ln1_b, w1, b1, w2, b2, ln2_g, ln2_b) = params

    def ln(v, g, b):
        mu = jnp.mean(v, axis=-1, keepdims=True)
        var = jnp.mean((v - mu) ** 2, axis=-1, keepdims=True)
        return (v - mu) / jnp.sqrt(var + EPS) * g + b

    q = x @ wq + bq
    k = x @ wk + bk
    v = x @ wv + bv
    q = q.reshape(B, S, H, DH).transpose(0, 2, 1, 3)
    k = k.reshape(B, S, H, DH).transpose(0, 2, 1, 3)
    v = v.reshape(B, S, H, DH).transpose(0, 2, 1, 3)
    scores = jnp.einsum("bhqd,bhkd->bhqk", q, k) / math.sqrt(DH)
    scores = jnp.where(mask[:, None, :, :] > 0, scores, -1e9)
    p = jax.nn.softmax(scores, axis=-1)
    attn = jnp.einsum("bhqk,bhkd->bhqd", p, v).transpose(0, 2, 1, 3).reshape(B, S, D)
    attn = attn @ wo + bo
    h1 = ln(x + attn, ln1_g, ln1_b)
    ff = jax.nn.relu(h1 @ w1 + b1) @ w2 + b2
    return ln(h1 + ff, ln2_g, ln2_b)


def init_params(key):
    ks = jax.random.split(key, 8)

    def lin(k, fan_in, fan_out):
        lim = 1.0 / math.sqrt(fan_in)
        return jax.random.uniform(k, (fan_in, fan_out), jnp.float32, -lim, lim)

    wq = lin(ks[0], D, D); wk = lin(ks[1], D, D); wv = lin(ks[2], D, D)
    wo = lin(ks[3], D, D)
    w1 = lin(ks[4], D, DFF); w2 = lin(ks[5], DFF, D)
    bq = jax.random.uniform(ks[6], (1, D), jnp.float32, -0.05, 0.05)
    bk = jnp.zeros((1, D), jnp.float32)
    bv = jnp.zeros((1, D), jnp.float32)
    bo = jnp.zeros((1, D), jnp.float32)
    b1 = jax.random.uniform(ks[7], (1, DFF), jnp.float32, -0.05, 0.05)
    b2 = jnp.zeros((1, D), jnp.float32)
    ln1_g = jnp.ones((1, D), jnp.float32); ln1_b = jnp.zeros((1, D), jnp.float32)
    ln2_g = jnp.ones((1, D), jnp.float32); ln2_b = jnp.zeros((1, D), jnp.float32)
    return (wq, bq, wk, bk, wv, bv, wo, bo,
            ln1_g, ln1_b, w1, b1, w2, b2, ln2_g, ln2_b)


if __name__ == "__main__":
    key = jax.random.PRNGKey(0)
    kx, km, kp = jax.random.split(key, 3)
    x = jax.random.normal(kx, (B, S, D), jnp.float32)
    # padding-style mask: 1 = attend, 0 = masked (keys only), broadcast over queries
    key_keep = (jax.random.uniform(km, (B, 1, S)) > 0.2).astype(jnp.float32)
    mask = jnp.broadcast_to(key_keep, (B, S, S))
    params = init_params(kp)

    out = encoder_layer(x, mask, params)
    out = jax.block_until_ready(out)

    ref = reference(x, mask, params)
    assert jnp.allclose(out, ref, atol=1e-4, rtol=1e-4), "mismatch vs reference"
    print("KERNEL_OK")
</pallas_src>

<mosaic_0001>
module attributes {stable_mosaic.version = 11 : i64} {
  func.func @encoder_layer_kernel(%arg0: i32, %arg1: memref<2x8x32xf32, #tpu.memory_space<vmem>>, %arg2: memref<2x8x8xf32, #tpu.memory_space<vmem>>, %arg3: memref<32x128xf32, #tpu.memory_space<vmem>>, %arg4: memref<1x128xf32, #tpu.memory_space<vmem>>, %arg5: memref<32x64xf32, #tpu.memory_space<vmem>>, %arg6: memref<1x64xf32, #tpu.memory_space<vmem>>, %arg7: memref<64x32xf32, #tpu.memory_space<vmem>>, %arg8: memref<5x32xf32, #tpu.memory_space<vmem>>, %arg9: memref<2x8x32xf32, #tpu.memory_space<vmem>>) attributes {dimension_semantics = [#tpu.dimension_semantics<arbitrary>], iteration_bounds = array<i64: 1>, scalar_prefetch = 0 : i64, scratch_operands = 0 : i64, tpu.core_type = #tpu.core_type<tc>, window_params = [{pipeline_mode = #tpu.pipeline_mode<synchronous>, transform_indices = @transform_0, window_bounds = array<i64: 2, 8, 32>}, {pipeline_mode = #tpu.pipeline_mode<synchronous>, transform_indices = @transform_1, window_bounds = array<i64: 2, 8, 8>}, {pipeline_mode = #tpu.pipeline_mode<synchronous>, transform_indices = @transform_2, window_bounds = array<i64: 32, 128>}, {pipeline_mode = #tpu.pipeline_mode<synchronous>, transform_indices = @transform_3, window_bounds = array<i64: 1, 128>}, {pipeline_mode = #tpu.pipeline_mode<synchronous>, transform_indices = @transform_4, window_bounds = array<i64: 32, 64>}, {pipeline_mode = #tpu.pipeline_mode<synchronous>, transform_indices = @transform_5, window_bounds = array<i64: 1, 64>}, {pipeline_mode = #tpu.pipeline_mode<synchronous>, transform_indices = @transform_6, window_bounds = array<i64: 64, 32>}, {pipeline_mode = #tpu.pipeline_mode<synchronous>, transform_indices = @transform_7, window_bounds = array<i64: 5, 32>}, {pipeline_mode = #tpu.pipeline_mode<synchronous>, transform_indices = @transform_8, window_bounds = array<i64: 2, 8, 32>}]} {
    %c0 = arith.constant 0 : index
    %c0_0 = arith.constant 0 : index
    %c0_1 = arith.constant 0 : index
    %0 = vector.load %arg1[%c0, %c0_0, %c0_1] : memref<2x8x32xf32, #tpu.memory_space<vmem>>, vector<2x8x32xf32>
    %1 = vector.shape_cast %0 : vector<2x8x32xf32> to vector<16x32xf32>
    %c0_2 = arith.constant 0 : index
    %c0_3 = arith.constant 0 : index
    %c0_4 = arith.constant 0 : index
    %2 = vector.load %arg2[%c0_2, %c0_3, %c0_4] : memref<2x8x8xf32, #tpu.memory_space<vmem>>, vector<2x8x8xf32>
    %c0_5 = arith.constant 0 : index
    %c0_6 = arith.constant 0 : index
    %3 = vector.load %arg3[%c0_5, %c0_6] : memref<32x128xf32, #tpu.memory_space<vmem>>, vector<32x128xf32>
    %c0_7 = arith.constant 0 : index
    %c0_8 = arith.constant 0 : index
    %4 = vector.load %arg4[%c0_7, %c0_8] : memref<1x128xf32, #tpu.memory_space<vmem>>, vector<1x128xf32>
    %5 = vector.extract_strided_slice %3 {offsets = [0, 0], sizes = [32, 96], strides = [1, 1]} : vector<32x128xf32> to vector<32x96xf32>
    %cst = arith.constant dense<0.000000e+00> : vector<16x96xf32>
    %6 = tpu.matmul %1, %5, %cst {dimension_numbers = #tpu.dot_dimension_numbers<[1], [0], [0], [1], [0, 0, 1, 1], [], []>} : vector<16x32xf32>, vector<32x96xf32>, vector<16x96xf32> -> vector<16x96xf32>
    %7 = vector.extract_strided_slice %4 {offsets = [0, 0], sizes = [1, 96], strides = [1, 1]} : vector<1x128xf32> to vector<1x96xf32>
    %8 = vector.broadcast %7 : vector<1x96xf32> to vector<16x96xf32>
    %9 = arith.addf %6, %8 : vector<16x96xf32>
    %10 = vector.extract_strided_slice %9 {offsets = [0, 0], sizes = [16, 32], strides = [1, 1]} : vector<16x96xf32> to vector<16x32xf32>
    %11 = vector.shape_cast %10 : vector<16x32xf32> to vector<2x8x32xf32>
    %12 = vector.extract_strided_slice %9 {offsets = [0, 32], sizes = [16, 32], strides = [1, 1]} : vector<16x96xf32> to vector<16x32xf32>
    %13 = vector.shape_cast %12 : vector<16x32xf32> to vector<2x8x32xf32>
    %14 = vector.extract_strided_slice %9 {offsets = [0, 64], sizes = [16, 32], strides = [1, 1]} : vector<16x96xf32> to vector<16x32xf32>
    %15 = vector.shape_cast %14 : vector<16x32xf32> to vector<2x8x32xf32>
    %16 = vector.extract_strided_slice %3 {offsets = [0, 96], sizes = [32, 32], strides = [1, 1]} : vector<32x128xf32> to vector<32x32xf32>
    %17 = vector.extract_strided_slice %4 {offsets = [0, 96], sizes = [1, 32], strides = [1, 1]} : vector<1x128xf32> to vector<1x32xf32>
    %cst_9 = arith.constant 0.000000e+00 : f32
    %18 = vector.broadcast %cst_9 : f32 to vector<16x32xf32>
    %19 = vector.extract_strided_slice %11 {offsets = [0, 0, 0], sizes = [2, 8, 8], strides = [1, 1, 1]} : vector<2x8x32xf32> to vector<2x8x8xf32>
    %20 = vector.extract_strided_slice %13 {offsets = [0, 0, 0], sizes = [2, 8, 8], strides = [1, 1, 1]} : vector<2x8x32xf32> to vector<2x8x8xf32>
    %21 = vector.extract_strided_slice %15 {offsets = [0, 0, 0], sizes = [2, 8, 8], strides = [1, 1, 1]} : vector<2x8x32xf32> to vector<2x8x8xf32>
    "tpu.trace_start"() <{level = 10 : i32, message = "bqd,bkd->bqk"}> : () -> ()
    %cst_10 = arith.constant dense<0.000000e+00> : vector<2x8x8xf32>
    %22 = tpu.matmul %19, %20, %cst_10 {dimension_numbers = #tpu.dot_dimension_numbers<[2], [2], [1], [1], [0, 0, 0, 1, 1, 1], [0], [0]>} : vector<2x8x8xf32>, vector<2x8x8xf32>, vector<2x8x8xf32> -> vector<2x8x8xf32>
    "tpu.trace_stop"() : () -> ()
    %cst_11 = arith.constant 0.353553385 : f32
    %23 = vector.broadcast %cst_11 : f32 to vector<2x8x8xf32>
    %24 = arith.mulf %22, %23 : vector<2x8x8xf32>
    %cst_12 = arith.constant 0.000000e+00 : f32
    %25 = vector.broadcast %cst_12 : f32 to vector<2x8x8xf32>
    %26 = arith.cmpf ogt, %2, %25 : vector<2x8x8xf32>
    %cst_13 = arith.constant -1.000000e+09 : f32
    %27 = vector.broadcast %cst_13 : f32 to vector<2x8x8xf32>
    %28 = arith.select %26, %24, %27 : vector<2x8x8xi1>, vector<2x8x8xf32>
    %cst_14 = arith.constant dense<0xFF800000> : vector<2x8xf32>
    %29 = vector.multi_reduction <maximumf>, %28, %cst_14 [2] : vector<2x8x8xf32> to vector<2x8xf32>
    %30 = vector.shape_cast %29 : vector<2x8xf32> to vector<2x8x1xf32>
    %31 = vector.broadcast %30 : vector<2x8x1xf32> to vector<2x8x8xf32>
    %32 = arith.subf %28, %31 : vector<2x8x8xf32>
    %33 = math.exp %32 : vector<2x8x8xf32>
    %cst_15 = arith.constant dense<0.000000e+00> : vector<2x8xf32>
    %34 = vector.multi_reduction <add>, %33, %cst_15 [2] : vector<2x8x8xf32> to vector<2x8xf32>
    %35 = vector.shape_cast %34 : vector<2x8xf32> to vector<2x8x1xf32>
    %36 = tpu.reciprocal %35 : vector<2x8x1xf32> -> vector<2x8x1xf32>
    %37 = vector.broadcast %36 : vector<2x8x1xf32> to vector<2x8x8xf32>
    %38 = arith.mulf %33, %37 : vector<2x8x8xf32>
    "tpu.trace_start"() <{level = 10 : i32, message = "bqk,bkd->bqd"}> : () -> ()
    %cst_16 = arith.constant dense<0.000000e+00> : vector<2x8x8xf32>
    %39 = tpu.matmul %38, %21, %cst_16 {dimension_numbers = #tpu.dot_dimension_numbers<[2], [1], [1], [2], [0, 0, 0, 1, 1, 2], [0], [0]>} : vector<2x8x8xf32>, vector<2x8x8xf32>, vector<2x8x8xf32> -> vector<2x8x8xf32>
    "tpu.trace_stop"() : () -> ()
    %40 = vector.shape_cast %39 : vector<2x8x8xf32> to vector<16x8xf32>
    %41 = vector.extract_strided_slice %16 {offsets = [0, 0], sizes = [8, 32], strides = [1, 1]} : vector<32x32xf32> to vector<8x32xf32>
    %cst_17 = arith.constant dense<0.000000e+00> : vector<16x32xf32>
    %42 = tpu.matmul %40, %41, %cst_17 {dimension_numbers = #tpu.dot_dimension_numbers<[1], [0], [0], [1], [0, 0, 1, 1], [], []>} : vector<16x8xf32>, vector<8x32xf32>, vector<16x32xf32> -> vector<16x32xf32>
    %43 = arith.addf %18, %42 : vector<16x32xf32>
    %44 = vector.extract_strided_slice %11 {offsets = [0, 0, 8], sizes = [2, 8, 8], strides = [1, 1, 1]} : vector<2x8x32xf32> to vector<2x8x8xf32>
    %45 = vector.extract_strided_slice %13 {offsets = [0, 0, 8], sizes = [2, 8, 8], strides = [1, 1, 1]} : vector<2x8x32xf32> to vector<2x8x8xf32>
    %46 = vector.extract_strided_slice %15 {offsets = [0, 0, 8], sizes = [2, 8, 8], strides = [1, 1, 1]} : vector<2x8x32xf32> to vector<2x8x8xf32>
    "tpu.trace_start"() <{level = 10 : i32, message = "bqd,bkd->bqk"}> : () -> ()
    %cst_18 = arith.constant dense<0.000000e+00> : vector<2x8x8xf32>
    %47 = tpu.matmul %44, %45, %cst_18 {dimension_numbers = #tpu.dot_dimension_numbers<[2], [2], [1], [1], [0, 0, 0, 1, 1, 1], [0], [0]>} : vector<2x8x8xf32>, vector<2x8x8xf32>, vector<2x8x8xf32> -> vector<2x8x8xf32>
    "tpu.trace_stop"() : () -> ()
    %cst_19 = arith.constant 0.353553385 : f32
    %48 = vector.broadcast %cst_19 : f32 to vector<2x8x8xf32>
    %49 = arith.mulf %47, %48 : vector<2x8x8xf32>
    %cst_20 = arith.constant 0.000000e+00 : f32
    %50 = vector.broadcast %cst_20 : f32 to vector<2x8x8xf32>
    %51 = arith.cmpf ogt, %2, %50 : vector<2x8x8xf32>
    %cst_21 = arith.constant -1.000000e+09 : f32
    %52 = vector.broadcast %cst_21 : f32 to vector<2x8x8xf32>
    %53 = arith.select %51, %49, %52 : vector<2x8x8xi1>, vector<2x8x8xf32>
    %cst_22 = arith.constant dense<0xFF800000> : vector<2x8xf32>
    %54 = vector.multi_reduction <maximumf>, %53, %cst_22 [2] : vector<2x8x8xf32> to vector<2x8xf32>
    %55 = vector.shape_cast %54 : vector<2x8xf32> to vector<2x8x1xf32>
    %56 = vector.broadcast %55 : vector<2x8x1xf32> to vector<2x8x8xf32>
    %57 = arith.subf %53, %56 : vector<2x8x8xf32>
    %58 = math.exp %57 : vector<2x8x8xf32>
    %cst_23 = arith.constant dense<0.000000e+00> : vector<2x8xf32>
    %59 = vector.multi_reduction <add>, %58, %cst_23 [2] : vector<2x8x8xf32> to vector<2x8xf32>
    %60 = vector.shape_cast %59 : vector<2x8xf32> to vector<2x8x1xf32>
    %61 = tpu.reciprocal %60 : vector<2x8x1xf32> -> vector<2x8x1xf32>
    %62 = vector.broadcast %61 : vector<2x8x1xf32> to vector<2x8x8xf32>
    %63 = arith.mulf %58, %62 : vector<2x8x8xf32>
    "tpu.trace_start"() <{level = 10 : i32, message = "bqk,bkd->bqd"}> : () -> ()
    %cst_24 = arith.constant dense<0.000000e+00> : vector<2x8x8xf32>
    %64 = tpu.matmul %63, %46, %cst_24 {dimension_numbers = #tpu.dot_dimension_numbers<[2], [1], [1], [2], [0, 0, 0, 1, 1, 2], [0], [0]>} : vector<2x8x8xf32>, vector<2x8x8xf32>, vector<2x8x8xf32> -> vector<2x8x8xf32>
    "tpu.trace_stop"() : () -> ()
    %65 = vector.shape_cast %64 : vector<2x8x8xf32> to vector<16x8xf32>
    %66 = vector.extract_strided_slice %16 {offsets = [8, 0], sizes = [8, 32], strides = [1, 1]} : vector<32x32xf32> to vector<8x32xf32>
    %cst_25 = arith.constant dense<0.000000e+00> : vector<16x32xf32>
    %67 = tpu.matmul %65, %66, %cst_25 {dimension_numbers = #tpu.dot_dimension_numbers<[1], [0], [0], [1], [0, 0, 1, 1], [], []>} : vector<16x8xf32>, vector<8x32xf32>, vector<16x32xf32> -> vector<16x32xf32>
    %68 = arith.addf %43, %67 : vector<16x32xf32>
    %69 = vector.extract_strided_slice %11 {offsets = [0, 0, 16], sizes = [2, 8, 8], strides = [1, 1, 1]} : vector<2x8x32xf32> to vector<2x8x8xf32>
    %70 = vector.extract_strided_slice %13 {offsets = [0, 0, 16], sizes = [2, 8, 8], strides = [1, 1, 1]} : vector<2x8x32xf32> to vector<2x8x8xf32>
    %71 = vector.extract_strided_slice %15 {offsets = [0, 0, 16], sizes = [2, 8, 8], strides = [1, 1, 1]} : vector<2x8x32xf32> to vector<2x8x8xf32>
    "tpu.trace_start"() <{level = 10 : i32, message = "bqd,bkd->bqk"}> : () -> ()
    %cst_26 = arith.constant dense<0.000000e+00> : vector<2x8x8xf32>
    %72 = tpu.matmul %69, %70, %cst_26 {dimension_numbers = #tpu.dot_dimension_numbers<[2], [2], [1], [1], [0, 0, 0, 1, 1, 1], [0], [0]>} : vector<2x8x8xf32>, vector<2x8x8xf32>, vector<2x8x8xf32> -> vector<2x8x8xf32>
    "tpu.trace_stop"() : () -> ()
    %cst_27 = arith.constant 0.353553385 : f32
    %73 = vector.broadcast %cst_27 : f32 to vector<2x8x8xf32>
    %74 = arith.mulf %72, %73 : vector<2x8x8xf32>
    %cst_28 = arith.constant 0.000000e+00 : f32
    %75 = vector.broadcast %cst_28 : f32 to vector<2x8x8xf32>
    %76 = arith.cmpf ogt, %2, %75 : vector<2x8x8xf32>
    %cst_29 = arith.constant -1.000000e+09 : f32
    %77 = vector.broadcast %cst_29 : f32 to vector<2x8x8xf32>
    %78 = arith.select %76, %74, %77 : vector<2x8x8xi1>, vector<2x8x8xf32>
    %cst_30 = arith.constant dense<0xFF800000> : vector<2x8xf32>
    %79 = vector.multi_reduction <maximumf>, %78, %cst_30 [2] : vector<2x8x8xf32> to vector<2x8xf32>
    %80 = vector.shape_cast %79 : vector<2x8xf32> to vector<2x8x1xf32>
    %81 = vector.broadcast %80 : vector<2x8x1xf32> to vector<2x8x8xf32>
    %82 = arith.subf %78, %81 : vector<2x8x8xf32>
    %83 = math.exp %82 : vector<2x8x8xf32>
    %cst_31 = arith.constant dense<0.000000e+00> : vector<2x8xf32>
    %84 = vector.multi_reduction <add>, %83, %cst_31 [2] : vector<2x8x8xf32> to vector<2x8xf32>
    %85 = vector.shape_cast %84 : vector<2x8xf32> to vector<2x8x1xf32>
    %86 = tpu.reciprocal %85 : vector<2x8x1xf32> -> vector<2x8x1xf32>
    %87 = vector.broadcast %86 : vector<2x8x1xf32> to vector<2x8x8xf32>
    %88 = arith.mulf %83, %87 : vector<2x8x8xf32>
    "tpu.trace_start"() <{level = 10 : i32, message = "bqk,bkd->bqd"}> : () -> ()
    %cst_32 = arith.constant dense<0.000000e+00> : vector<2x8x8xf32>
    %89 = tpu.matmul %88, %71, %cst_32 {dimension_numbers = #tpu.dot_dimension_numbers<[2], [1], [1], [2], [0, 0, 0, 1, 1, 2], [0], [0]>} : vector<2x8x8xf32>, vector<2x8x8xf32>, vector<2x8x8xf32> -> vector<2x8x8xf32>
    "tpu.trace_stop"() : () -> ()
    %90 = vector.shape_cast %89 : vector<2x8x8xf32> to vector<16x8xf32>
    %91 = vector.extract_strided_slice %16 {offsets = [16, 0], sizes = [8, 32], strides = [1, 1]} : vector<32x32xf32> to vector<8x32xf32>
    %cst_33 = arith.constant dense<0.000000e+00> : vector<16x32xf32>
    %92 = tpu.matmul %90, %91, %cst_33 {dimension_numbers = #tpu.dot_dimension_numbers<[1], [0], [0], [1], [0, 0, 1, 1], [], []>} : vector<16x8xf32>, vector<8x32xf32>, vector<16x32xf32> -> vector<16x32xf32>
    %93 = arith.addf %68, %92 : vector<16x32xf32>
    %94 = vector.extract_strided_slice %11 {offsets = [0, 0, 24], sizes = [2, 8, 8], strides = [1, 1, 1]} : vector<2x8x32xf32> to vector<2x8x8xf32>
    %95 = vector.extract_strided_slice %13 {offsets = [0, 0, 24], sizes = [2, 8, 8], strides = [1, 1, 1]} : vector<2x8x32xf32> to vector<2x8x8xf32>
    %96 = vector.extract_strided_slice %15 {offsets = [0, 0, 24], sizes = [2, 8, 8], strides = [1, 1, 1]} : vector<2x8x32xf32> to vector<2x8x8xf32>
    "tpu.trace_start"() <{level = 10 : i32, message = "bqd,bkd->bqk"}> : () -> ()
    %cst_34 = arith.constant dense<0.000000e+00> : vector<2x8x8xf32>
    %97 = tpu.matmul %94, %95, %cst_34 {dimension_numbers = #tpu.dot_dimension_numbers<[2], [2], [1], [1], [0, 0, 0, 1, 1, 1], [0], [0]>} : vector<2x8x8xf32>, vector<2x8x8xf32>, vector<2x8x8xf32> -> vector<2x8x8xf32>
    "tpu.trace_stop"() : () -> ()
    %cst_35 = arith.constant 0.353553385 : f32
    %98 = vector.broadcast %cst_35 : f32 to vector<2x8x8xf32>
    %99 = arith.mulf %97, %98 : vector<2x8x8xf32>
    %cst_36 = arith.constant 0.000000e+00 : f32
    %100 = vector.broadcast %cst_36 : f32 to vector<2x8x8xf32>
    %101 = arith.cmpf ogt, %2, %100 : vector<2x8x8xf32>
    %cst_37 = arith.constant -1.000000e+09 : f32
    %102 = vector.broadcast %cst_37 : f32 to vector<2x8x8xf32>
    %103 = arith.select %101, %99, %102 : vector<2x8x8xi1>, vector<2x8x8xf32>
    %cst_38 = arith.constant dense<0xFF800000> : vector<2x8xf32>
    %104 = vector.multi_reduction <maximumf>, %103, %cst_38 [2] : vector<2x8x8xf32> to vector<2x8xf32>
    %105 = vector.shape_cast %104 : vector<2x8xf32> to vector<2x8x1xf32>
    %106 = vector.broadcast %105 : vector<2x8x1xf32> to vector<2x8x8xf32>
    %107 = arith.subf %103, %106 : vector<2x8x8xf32>
    %108 = math.exp %107 : vector<2x8x8xf32>
    %cst_39 = arith.constant dense<0.000000e+00> : vector<2x8xf32>
    %109 = vector.multi_reduction <add>, %108, %cst_39 [2] : vector<2x8x8xf32> to vector<2x8xf32>
    %110 = vector.shape_cast %109 : vector<2x8xf32> to vector<2x8x1xf32>
    %111 = tpu.reciprocal %110 : vector<2x8x1xf32> -> vector<2x8x1xf32>
    %112 = vector.broadcast %111 : vector<2x8x1xf32> to vector<2x8x8xf32>
    %113 = arith.mulf %108, %112 : vector<2x8x8xf32>
    "tpu.trace_start"() <{level = 10 : i32, message = "bqk,bkd->bqd"}> : () -> ()
    %cst_40 = arith.constant dense<0.000000e+00> : vector<2x8x8xf32>
    %114 = tpu.matmul %113, %96, %cst_40 {dimension_numbers = #tpu.dot_dimension_numbers<[2], [1], [1], [2], [0, 0, 0, 1, 1, 2], [0], [0]>} : vector<2x8x8xf32>, vector<2x8x8xf32>, vector<2x8x8xf32> -> vector<2x8x8xf32>
    "tpu.trace_stop"() : () -> ()
    %115 = vector.shape_cast %114 : vector<2x8x8xf32> to vector<16x8xf32>
    %116 = vector.extract_strided_slice %16 {offsets = [24, 0], sizes = [8, 32], strides = [1, 1]} : vector<32x32xf32> to vector<8x32xf32>
    %cst_41 = arith.constant dense<0.000000e+00> : vector<16x32xf32>
    %117 = tpu.matmul %115, %116, %cst_41 {dimension_numbers = #tpu.dot_dimension_numbers<[1], [0], [0], [1], [0, 0, 1, 1], [], []>} : vector<16x8xf32>, vector<8x32xf32>, vector<16x32xf32> -> vector<16x32xf32>
    %118 = arith.addf %93, %117 : vector<16x32xf32>
    %119 = vector.broadcast %17 : vector<1x32xf32> to vector<16x32xf32>
    %120 = arith.addf %118, %119 : vector<16x32xf32>
    %c0_42 = arith.constant 0 : index
    %c0_43 = arith.constant 0 : index
    %121 = vector.load %arg8[%c0_42, %c0_43] : memref<5x32xf32, #tpu.memory_space<vmem>>, vector<1x32xf32>
    %c1 = arith.constant 1 : index
    %c0_44 = arith.constant 0 : index
    %122 = vector.load %arg8[%c1, %c0_44] : memref<5x32xf32, #tpu.memory_space<vmem>>, vector<1x32xf32>
    %c2 = arith.constant 2 : index
    %c0_45 = arith.constant 0 : index
    %123 = vector.load %arg8[%c2, %c0_45] : memref<5x32xf32, #tpu.memory_space<vmem>>, vector<1x32xf32>
    %c3 = arith.constant 3 : index
    %c0_46 = arith.constant 0 : index
    %124 = vector.load %arg8[%c3, %c0_46] : memref<5x32xf32, #tpu.memory_space<vmem>>, vector<1x32xf32>
    %c4 = arith.constant 4 : index
    %c0_47 = arith.constant 0 : index
    %125 = vector.load %arg8[%c4, %c0_47] : memref<5x32xf32, #tpu.memory_space<vmem>>, vector<1x32xf32>
    %126 = arith.addf %1, %120 : vector<16x32xf32>
    %cst_48 = arith.constant dense<0.000000e+00> : vector<16xf32>
    %127 = vector.multi_reduction <add>, %126, %cst_48 [1] : vector<16x32xf32> to vector<16xf32>
    %128 = vector.shape_cast %127 : vector<16xf32> to vector<16x1xf32>
    %cst_49 = arith.constant 3.200000e+01 : f32
    %129 = vector.broadcast %cst_49 : f32 to vector<16x1xf32>
    %130 = arith.divf %128, %129 : vector<16x1xf32>
    %131 = vector.broadcast %130 : vector<16x1xf32> to vector<16x32xf32>
    %132 = arith.subf %126, %131 : vector<16x32xf32>
    %133 = arith.mulf %132, %132 : vector<16x32xf32>
    %cst_50 = arith.constant dense<0.000000e+00> : vector<16xf32>
    %134 = vector.multi_reduction <add>, %133, %cst_50 [1] : vector<16x32xf32> to vector<16xf32>
    %135 = vector.shape_cast %134 : vector<16xf32> to vector<16x1xf32>
    %cst_51 = arith.constant 3.200000e+01 : f32
    %136 = vector.broadcast %cst_51 : f32 to vector<16x1xf32>
    %137 = arith.divf %135, %136 : vector<16x1xf32>
    %cst_52 = arith.constant 9.99999974E-6 : f32
    %138 = vector.broadcast %cst_52 : f32 to vector<16x1xf32>
    %139 = arith.addf %137, %138 : vector<16x1xf32>
    %140 = math.rsqrt %139 : vector<16x1xf32>
    %141 = vector.broadcast %140 : vector<16x1xf32> to vector<16x32xf32>
    %142 = arith.mulf %132, %141 : vector<16x32xf32>
    %143 = vector.broadcast %122 : vector<1x32xf32> to vector<16x32xf32>
    %144 = arith.mulf %142, %143 : vector<16x32xf32>
    %145 = vector.broadcast %123 : vector<1x32xf32> to vector<16x32xf32>
    %146 = arith.addf %144, %145 : vector<16x32xf32>
    %c0_53 = arith.constant 0 : index
    %c0_54 = arith.constant 0 : index
    %147 = vector.load %arg5[%c0_53, %c0_54] : memref<32x64xf32, #tpu.memory_space<vmem>>, vector<32x64xf32>
    %cst_55 = arith.constant dense<0.000000e+00> : vector<16x64xf32>
    %148 = tpu.matmul %146, %147, %cst_55 {dimension_numbers = #tpu.dot_dimension_numbers<[1], [0], [0], [1], [0, 0, 1, 1], [], []>} : vector<16x32xf32>, vector<32x64xf32>, vector<16x64xf32> -> vector<16x64xf32>
    %c0_56 = arith.constant 0 : index
    %c0_57 = arith.constant 0 : index
    %149 = vector.load %arg6[%c0_56, %c0_57] : memref<1x64xf32, #tpu.memory_space<vmem>>, vector<1x64xf32>
    %150 = vector.broadcast %149 : vector<1x64xf32> to vector<16x64xf32>
    %151 = arith.addf %148, %150 : vector<16x64xf32>
    %cst_58 = arith.constant 0.000000e+00 : f32
    %152 = vector.broadcast %cst_58 : f32 to vector<16x64xf32>
    %153 = arith.maximumf %151, %152 : vector<16x64xf32>
    %c0_59 = arith.constant 0 : index
    %c0_60 = arith.constant 0 : index
    %154 = vector.load %arg7[%c0_59, %c0_60] : memref<64x32xf32, #tpu.memory_space<vmem>>, vector<64x32xf32>
    %cst_61 = arith.constant dense<0.000000e+00> : vector<16x32xf32>
    %155 = tpu.matmul %153, %154, %cst_61 {dimension_numbers = #tpu.dot_dimension_numbers<[1], [0], [0], [1], [0, 0, 1, 1], [], []>} : vector<16x64xf32>, vector<64x32xf32>, vector<16x32xf32> -> vector<16x32xf32>
    %156 = vector.broadcast %121 : vector<1x32xf32> to vector<16x32xf32>
    %157 = arith.addf %155, %156 : vector<16x32xf32>
    %158 = arith.addf %146, %157 : vector<16x32xf32>
    %cst_62 = arith.constant dense<0.000000e+00> : vector<16xf32>
    %159 = vector.multi_reduction <add>, %158, %cst_62 [1] : vector<16x32xf32> to vector<16xf32>
    %160 = vector.shape_cast %159 : vector<16xf32> to vector<16x1xf32>
    %cst_63 = arith.constant 3.200000e+01 : f32
    %161 = vector.broadcast %cst_63 : f32 to vector<16x1xf32>
    %162 = arith.divf %160, %161 : vector<16x1xf32>
    %163 = vector.broadcast %162 : vector<16x1xf32> to vector<16x32xf32>
    %164 = arith.subf %158, %163 : vector<16x32xf32>
    %165 = arith.mulf %164, %164 : vector<16x32xf32>
    %cst_64 = arith.constant dense<0.000000e+00> : vector<16xf32>
    %166 = vector.multi_reduction <add>, %165, %cst_64 [1] : vector<16x32xf32> to vector<16xf32>
    %167 = vector.shape_cast %166 : vector<16xf32> to vector<16x1xf32>
    %cst_65 = arith.constant 3.200000e+01 : f32
    %168 = vector.broadcast %cst_65 : f32 to vector<16x1xf32>
    %169 = arith.divf %167, %168 : vector<16x1xf32>
    %cst_66 = arith.constant 9.99999974E-6 : f32
    %170 = vector.broadcast %cst_66 : f32 to vector<16x1xf32>
    %171 = arith.addf %169, %170 : vector<16x1xf32>
    %172 = math.rsqrt %171 : vector<16x1xf32>
    %173 = vector.broadcast %172 : vector<16x1xf32> to vector<16x32xf32>
    %174 = arith.mulf %164, %173 : vector<16x32xf32>
    %175 = vector.broadcast %124 : vector<1x32xf32> to vector<16x32xf32>
    %176 = arith.mulf %174, %175 : vector<16x32xf32>
    %177 = vector.broadcast %125 : vector<1x32xf32> to vector<16x32xf32>
    %178 = arith.addf %176, %177 : vector<16x32xf32>
    %179 = vector.shape_cast %178 : vector<16x32xf32> to vector<2x8x32xf32>
    %c0_67 = arith.constant 0 : index
    %c0_68 = arith.constant 0 : index
    %c0_69 = arith.constant 0 : index
    %180 = vector.load %arg9[%c0_67, %c0_68, %c0_69] : memref<2x8x32xf32, #tpu.memory_space<vmem>>, vector<2x8x32xf32>
    tpu.vector_store %arg9[%c0_67, %c0_68, %c0_69], %179 {strides = array<i32>} : memref<2x8x32xf32, #tpu.memory_space<vmem>>, vector<2x8x32xf32>,
    return
  }
  func.func @transform_0(%arg0: i32) -> (i32, i32, i32) {
    %c0_i32 = arith.constant 0 : i32
    %c0_i32_0 = arith.constant 0 : i32
    %c0_i32_1 = arith.constant 0 : i32
    %c0_i32_2 = arith.constant 0 : i32
    return %c0_i32, %c0_i32_0, %c0_i32_1 : i32, i32, i32
  }
  func.func @transform_1(%arg0: i32) -> (i32, i32, i32) {
    %c0_i32 = arith.constant 0 : i32
    %c0_i32_0 = arith.constant 0 : i32
    %c0_i32_1 = arith.constant 0 : i32
    %c0_i32_2 = arith.constant 0 : i32
    return %c0_i32, %c0_i32_0, %c0_i32_1 : i32, i32, i32
  }
  func.func @transform_2(%arg0: i32) -> (i32, i32) {
    %c0_i32 = arith.constant 0 : i32
    %c0_i32_0 = arith.constant 0 : i32
    %c0_i32_1 = arith.constant 0 : i32
    return %c0_i32, %c0_i32_0 : i32, i32
  }
  func.func @transform_3(%arg0: i32) -> (i32, i32) {
    %c0_i32 = arith.constant 0 : i32
    %c0_i32_0 = arith.constant 0 : i32
    %c0_i32_1 = arith.constant 0 : i32
    return %c0_i32, %c0_i32_0 : i32, i32
  }
  func.func @transform_4(%arg0: i32) -> (i32, i32) {
    %c0_i32 = arith.constant 0 : i32
    %c0_i32_0 = arith.constant 0 : i32
    %c0_i32_1 = arith.constant 0 : i32
    return %c0_i32, %c0_i32_0 : i32, i32
  }
  func.func @transform_5(%arg0: i32) -> (i32, i32) {
    %c0_i32 = arith.constant 0 : i32
    %c0_i32_0 = arith.constant 0 : i32
    %c0_i32_1 = arith.constant 0 : i32
    return %c0_i32, %c0_i32_0 : i32, i32
  }
  func.func @transform_6(%arg0: i32) -> (i32, i32) {
    %c0_i32 = arith.constant 0 : i32
    %c0_i32_0 = arith.constant 0 : i32
    %c0_i32_1 = arith.constant 0 : i32
    return %c0_i32, %c0_i32_0 : i32, i32
  }
  func.func @transform_7(%arg0: i32) -> (i32, i32) {
    %c0_i32 = arith.constant 0 : i32
    %c0_i32_0 = arith.constant 0 : i32
    %c0_i32_1 = arith.constant 0 : i32
    return %c0_i32, %c0_i32_0 : i32, i32
  }
  func.func @transform_8(%arg0: i32) -> (i32, i32, i32) {
    %c0_i32 = arith.constant 0 : i32
    %c0_i32_0 = arith.constant 0 : i32
    %c0_i32_1 = arith.constant 0 : i32
    %c0_i32_2 = arith.constant 0 : i32
    return %c0_i32, %c0_i32_0, %c0_i32_1 : i32, i32, i32
  }
}

</mosaic_0001>

<llo_original>
// kernel: tpu_custom_call.1
$region0: #{tpu_custom_call.1}
  #allocation0 [shape = 'u32[]', space=smem, size = 0x4, offset = 0x4, fixed_abs, tag = 'smem constant byte address 0x4 - core index']
  #allocation1 [shape = 'u32[144,128]{1,0:T(1,128)}', space=vmem, size = 0x12000, scoped, tag = 'internal scratch']
  %s0 = inlined_call_operand.vmem [shape: f32[2,8,32], index: 0, kind: input, shape index: {}]
  %s1 = inlined_call_operand.vmem [shape: f32[2,8,8], index: 1, kind: input, shape index: {}]
  %s2 = inlined_call_operand.vmem [shape: f32[32,128], index: 2, kind: input, shape index: {}]
  %s3 = inlined_call_operand.vmem [shape: f32[1,128], index: 3, kind: input, shape index: {}]
  %s4 = inlined_call_operand.vmem [shape: f32[32,64], index: 4, kind: input, shape index: {}]
  %s5 = inlined_call_operand.vmem [shape: f32[1,64], index: 5, kind: input, shape index: {}]
  %s6 = inlined_call_operand.vmem [shape: f32[64,32], index: 6, kind: input, shape index: {}]
  %s7 = inlined_call_operand.vmem [shape: f32[5,32], index: 7, kind: input, shape index: {}]
  %s8 = inlined_call_operand.hbm [shape: f32[2,8,32], index: 8, kind: output, shape index: {}]
  %s9 = sld [smem:[#allocation0]]
  $region42: #{tpu_custom_call.1} parent=0
    _
  %s11 = ssub.s32 1, %s9
  %s12 = scalar_select 0, %s11, %s9
  $region1: #{tpu_custom_call.1} parent=0
    #allocation2 [shape = 'u8[8192]{0}', space=vmem, size = 0x2000, scoped, tag = 'output window, operand 0, single buffered']
    #allocation3 [shape = 's32[1]{0}', space=sflag, size = 0x4, scoped, tag = 'scoped memory for tpu_custom_call.1']
    %13 = vsyncpa [#allocation3], 0
    // Predicated region
    $region2: #{tpu_custom_call.1} parent=1 // pred_check
      _
    $region3: #{tpu_custom_call.1} parent=1 // pred_check_branch
      %15 = sbr.rel (0) target = $region5
    $region4: #{tpu_custom_call.1} parent=1 // pred_region
      _
    $region5: #{tpu_custom_call.1} parent=1 // pred_fallthru
      _
    // Predicated region
    $region6: #{tpu_custom_call.1} parent=1 // pred_check
      _
    $region7: #{tpu_custom_call.1} parent=1 // pred_check_branch
      %17 = sbr.rel (0) target = $region9
    $region8: #{tpu_custom_call.1} parent=1 // pred_region
      _
    $region9: #{tpu_custom_call.1} parent=1 // pred_fallthru
      _
    // Predicated region
    $region10: #{tpu_custom_call.1} parent=1 // pred_check
      _
    $region11: #{tpu_custom_call.1} parent=1 // pred_check_branch
      %19 = sbr.rel (0) target = $region13
    $region12: #{tpu_custom_call.1} parent=1 // pred_region
      _
    $region13: #{tpu_custom_call.1} parent=1 // pred_fallthru
      _
    // Predicated region
    $region14: #{tpu_custom_call.1} parent=1 // pred_check
      _
    $region15: #{tpu_custom_call.1} parent=1 // pred_check_branch
      %21 = sbr.rel (0) target = $region17
    $region16: #{tpu_custom_call.1} parent=1 // pred_region
      _
    $region17: #{tpu_custom_call.1} parent=1 // pred_fallthru
      _
    // Predicated region
    $region18: #{tpu_custom_call.1} parent=1 // pred_check
      _
    $region19: #{tpu_custom_call.1} parent=1 // pred_check_branch
      %23 = sbr.rel (0) target = $region21
    $region20: #{tpu_custom_call.1} parent=1 // pred_region
      _
    $region21: #{tpu_custom_call.1} parent=1 // pred_fallthru
      _
    // Predicated region
    $region22: #{tpu_custom_call.1} parent=1 // pred_check
      _
    $region23: #{tpu_custom_call.1} parent=1 // pred_check_branch
      %25 = sbr.rel (0) target = $region25
    $region24: #{tpu_custom_call.1} parent=1 // pred_region
      _
    $region25: #{tpu_custom_call.1} parent=1 // pred_fallthru
      _
    // Predicated region
    $region26: #{tpu_custom_call.1} parent=1 // pred_check
      _
    $region27: #{tpu_custom_call.1} parent=1 // pred_check_branch
      %27 = sbr.rel (0) target = $region29
    $region28: #{tpu_custom_call.1} parent=1 // pred_region
      _
    $region29: #{tpu_custom_call.1} parent=1 // pred_fallthru
      _
    // Predicated region
    $region30: #{tpu_custom_call.1} parent=1 // pred_check
      _
    $region31: #{tpu_custom_call.1} parent=1 // pred_check_branch
      %29 = sbr.rel (0) target = $region33
    $region32: #{tpu_custom_call.1} parent=1 // pred_region
      _
    $region33: #{tpu_custom_call.1} parent=1 // pred_fallthru
      _
    %v30 = vld [vmem:[%s0] sm:$0xff]
    %v31 = vld [vmem:[%s0 + $0x8] sm:$0xff]
    %v32 = vld [vmem:[%s1] sm:$0xff]
    %v33 = vld [vmem:[%s1 + $0x8] sm:$0xff]
    %v34 = vld [vmem:[%s2] sm:$0xff]
    %v35 = vld [vmem:[%s2 + $0x8] sm:$0xff]
    %v36 = vld [vmem:[%s2 + $0x10] sm:$0xff]
    %v37 = vld [vmem:[%s2 + $0x18] sm:$0xff]
    %v38 = vld [vmem:[%s3] sm:$0x1]
    %v40 = vlaneseq
    %v41 = vshrl.u32 %v40, 7
    %v42 = vsub.s32 0, %v41
    %v43 = vrot.slane %v38, %v42
    %vm45 = vcmask 261120
    %v47 = vsel %vm45, %v30, 0
    %v50 = vsel %vm45, %v31, 0
    %52 = vmatprep.subr.mxu0 0.0
    %53 = vmatpush1.msra.mxu0 %v34
    %54 = vmatprep.subr.mxu0 0.0
    %55 = vmatpush1.msra.mxu0 %v35
    %56 = vmatprep.subr.mxu0 0.0
    %57 = vmatpush1.msra.mxu0 %v36
    %58 = vmatprep.subr.mxu0 0.0
    %59 = vmatpush1.msra.mxu0 %v37
    %60 = vmatprep.subr.mxu0 0.0
    %61 = vmatpush1.msra.mxu0 0.0
    %62 = vmatprep.subr.mxu0 0.0
    %63 = vmatpush1.msra.mxu0 0.0
    %64 = vmatprep.subr.mxu0 0.0
    %65 = vmatpush1.msra.mxu0 0.0
    %66 = vmatprep.subr.mxu0 0.0
    %67 = vmatpush1.msra.mxu0 0.0
    %68 = vmatprep.subr.mxu0 0.0
    %69 = vmatpush1.msra.mxu0 0.0
    %70 = vmatprep.subr.mxu0 0.0
    %71 = vmatpush1.msra.mxu0 0.0
    %72 = vmatprep.subr.mxu0 0.0
    %73 = vmatpush1.msra.mxu0 0.0
    %74 = vmatprep.subr.mxu0 0.0
    %75 = vmatpush1.msra.mxu0 0.0
    %76 = vmatprep.subr.mxu0 0.0
    %77 = vmatpush1.msra.mxu0 0.0
    %78 = vmatprep.subr.mxu0 0.0
    %79 = vmatpush1.msra.mxu0 0.0
    %80 = vmatprep.subr.mxu0 0.0
    %81 = vmatpush1.msra.mxu0 0.0
    %82 = vmatprep.subr.mxu0 0.0
    %83 = vmatpush1.msra.mxu0 0.0
    %84 = vmatprep.subr.mxu0 0.0
    %85 = vmatpush1.msra.mxu0 0.0
    %86 = vmatprep.subr.mxu0 0.0
    %87 = vmatpush1.msra.mxu0 0.0
    %88 = vmatprep.subr.mxu0 0.0
    %89 = vmatpush1.msra.mxu0 0.0
    %90 = vmatprep.subr.mxu0 0.0
    %91 = vmatpush1.msra.mxu0 0.0
    %92 = vmatprep.subr.mxu0 0.0
    %93 = vmatpush1.msra.mxu0 0.0
    %94 = vmatprep.subr.mxu0 0.0
    %95 = vmatpush1.msra.mxu0 0.0
    %96 = vmatprep.subr.mxu0 0.0
    %97 = vmatpush1.msra.mxu0 0.0
    %98 = vmatprep.subr.mxu0 0.0
    %99 = vmatpush1.msra.mxu0 0.0
    %100 = vmatprep.subr.mxu0 0.0
    %101 = vmatpush1.msra.mxu0 0.0
    %102 = vmatprep.subr.mxu0 0.0
    %103 = vmatpush1.msra.mxu0 0.0
    %104 = vmatprep.subr.mxu0 0.0
    %105 = vmatpush1.msra.mxu0 0.0
    %106 = vmatprep.subr.mxu0 0.0
    %107 = vmatpush1.msra.mxu0 0.0
    %108 = vmatprep.subr.mxu0 0.0
    %109 = vmatpush1.msra.mxu0 0.0
    %110 = vmatprep.subr.mxu0 0.0
    %111 = vmatpush1.msra.mxu0 0.0
    %112 = vmatprep.subr.mxu0 0.0
    %113 = vmatpush1.msra.mxu0 0.0
    %114 = vmatprep.subr.mxu0 0.0
    %115 = vmatpush1.msra.mxu0 0.0
    %116 = vmatprep.mubr.f32.mxu0 0.0
    %117 = vmatmul.mubr.f32.gmra.mrb[0].mxu0 %v47
    %v118 = vpop.f32.mrb[0].mxu0
    %v119 = vadd.f32 %v43, %v118
    %v120 = vpop.f32.mrb[0].mxu0
    %121 = vmatprep.mubr.f32.mxu0 0.0
    %122 = vmatmul.mubr.f32.gmra.mrb[0].mxu0 %v50
    %v123 = vpop.f32.mrb[0].mxu0
    %v124 = vadd.f32 %v43, %v123
    %v125 = vpop.f32.mrb[0].mxu0
    %126 = vdwg.mxu0
    %128 = vrot.lane.b32.xlu0 %v119, 96
    %v129 = vpop.permute.xlu0 %128
    %vm130 = vcmask 64512
    %v131 = vsel %vm130, %v119, 0
    %v133 = vsel %vm130, %v129, 0
    %135 = vmatprep.subr.mxu0 0.0
    %136 = vmatpush1.xpose.msra.mxu0 %v133
    %137 = vmatprep.subr.mxu0 0.0
    %138 = vmatpush1.xpose.msra.mxu0 0.0
    %139 = vmatprep.subr.mxu0 0.0
    %140 = vmatpush1.xpose.msra.mxu0 0.0
    %141 = vmatprep.subr.mxu0 0.0
    %142 = vmatpush1.xpose.msra.mxu0 0.0
    %143 = vmatprep.subr.mxu0 0.0
    %144 = vmatpush1.xpose.msra.mxu0 0.0
    %145 = vmatprep.subr.mxu0 0.0
    %146 = vmatpush1.xpose.msra.mxu0 0.0
    %147 = vmatprep.subr.mxu0 0.0
    %148 = vmatpush1.xpose.msra.mxu0 0.0
    %149 = vmatprep.subr.mxu0 0.0
    %150 = vmatpush1.xpose.msra.mxu0 0.0
    %151 = vmatprep.subr.mxu0 0.0
    %152 = vmatpush1.xpose.msra.mxu0 0.0
    %153 = vmatprep.subr.mxu0 0.0
    %154 = vmatpush1.xpose.msra.mxu0 0.0
    %155 = vmatprep.subr.mxu0 0.0
    %156 = vmatpush1.xpose.msra.mxu0 0.0
    %157 = vmatprep.subr.mxu0 0.0
    %158 = vmatpush1.xpose.msra.mxu0 0.0
    %159 = vmatprep.subr.mxu0 0.0
    %160 = vmatpush1.xpose.msra.mxu0 0.0
    %161 = vmatprep.subr.mxu0 0.0
    %162 = vmatpush1.xpose.msra.mxu0 0.0
    %163 = vmatprep.subr.mxu0 0.0
    %164 = vmatpush1.xpose.msra.mxu0 0.0
    %165 = vmatprep.subr.mxu0 0.0
    %166 = vmatpush1.xpose.msra.mxu0 0.0
    %167 = vmatprep.subr.mxu0 0.0
    %168 = vmatpush1.xpose.msra.mxu0 0.0
    %169 = vmatprep.subr.mxu0 0.0
    %170 = vmatpush1.xpose.msra.mxu0 0.0
    %171 = vmatprep.subr.mxu0 0.0
    %172 = vmatpush1.xpose.msra.mxu0 0.0
    %173 = vmatprep.subr.mxu0 0.0
    %174 = vmatpush1.xpose.msra.mxu0 0.0
    %175 = vmatprep.subr.mxu0 0.0
    %176 = vmatpush1.xpose.msra.mxu0 0.0
    %177 = vmatprep.subr.mxu0 0.0
    %178 = vmatpush1.xpose.msra.mxu0 0.0
    %179 = vmatprep.subr.mxu0 0.0
    %180 = vmatpush1.xpose.msra.mxu0 0.0
    %181 = vmatprep.subr.mxu0 0.0
    %182 = vmatpush1.xpose.msra.mxu0 0.0
    %183 = vmatprep.subr.mxu0 0.0
    %184 = vmatpush1.xpose.msra.mxu0 0.0
    %185 = vmatprep.subr.mxu0 0.0
    %186 = vmatpush1.xpose.msra.mxu0 0.0
    %187 = vmatprep.subr.mxu0 0.0
    %188 = vmatpush1.xpose.msra.mxu0 0.0
    %189 = vmatprep.subr.mxu0 0.0
    %190 = vmatpush1.xpose.msra.mxu0 0.0
    %191 = vmatprep.subr.mxu0 0.0
    %192 = vmatpush1.xpose.msra.mxu0 0.0
    %193 = vmatprep.subr.mxu0 0.0
    %194 = vmatpush1.xpose.msra.mxu0 0.0
    %195 = vmatprep.subr.mxu0 0.0
    %196 = vmatpush1.xpose.msra.mxu0 0.0
    %197 = vmatprep.subr.mxu0 0.0
    %198 = vmatpush1.xpose.msra.mxu0 0.0
    %199 = vmatprep.mubr.f32.mxu0 0.0
    %200 = vmatmul.mubr.f32.gmra.mrb[0].mxu0 %v131
    %v201 = vpop.f32.mrb[0].mxu0
    %v202 = vadd.f32 0.0, %v201
    %v203 = vpop.f32.mrb[0].mxu0
    %204 = vdwg.mxu0
    %206 = vrot.lane.b32.xlu0 %v124, 96
    %v207 = vpop.permute.xlu0 %206
    %v208 = vsel %vm130, %v124, 0
    %v210 = vsel %vm130, %v207, 0
    %212 = vmatprep.subr.mxu0 0.0
    %213 = vmatpush1.xpose.msra.mxu0 %v210
    %214 = vmatprep.subr.mxu0 0.0
    %215 = vmatpush1.xpose.msra.mxu0 0.0
    %216 = vmatprep.subr.mxu0 0.0
    %217 = vmatpush1.xpose.msra.mxu0 0.0
    %218 = vmatprep.subr.mxu0 0.0
    %219 = vmatpush1.xpose.msra.mxu0 0.0
    %220 = vmatprep.subr.mxu0 0.0
    %221 = vmatpush1.xpose.msra.mxu0 0.0
    %222 = vmatprep.subr.mxu0 0.0
    %223 = vmatpush1.xpose.msra.mxu0 0.0
    %224 = vmatprep.subr.mxu0 0.0
    %225 = vmatpush1.xpose.msra.mxu0 0.0
    %226 = vmatprep.subr.mxu0 0.0
    %227 = vmatpush1.xpose.msra.mxu0 0.0
    %228 = vmatprep.subr.mxu0 0.0
    %229 = vmatpush1.xpose.msra.mxu0 0.0
    %230 = vmatprep.subr.mxu0 0.0
    %231 = vmatpush1.xpose.msra.mxu0 0.0
    %232 = vmatprep.subr.mxu0 0.0
    %233 = vmatpush1.xpose.msra.mxu0 0.0
    %234 = vmatprep.subr.mxu0 0.0
    %235 = vmatpush1.xpose.msra.mxu0 0.0
    %236 = vmatprep.subr.mxu0 0.0
    %237 = vmatpush1.xpose.msra.mxu0 0.0
    %238 = vmatprep.subr.mxu0 0.0
    %239 = vmatpush1.xpose.msra.mxu0 0.0
    %240 = vmatprep.subr.mxu0 0.0
    %241 = vmatpush1.xpose.msra.mxu0 0.0
    %242 = vmatprep.subr.mxu0 0.0
    %243 = vmatpush1.xpose.msra.mxu0 0.0
    %244 = vmatprep.subr.mxu0 0.0
    %245 = vmatpush1.xpose.msra.mxu0 0.0
    %246 = vmatprep.subr.mxu0 0.0
    %247 = vmatpush1.xpose.msra.mxu0 0.0
    %248 = vmatprep.subr.mxu0 0.0
    %249 = vmatpush1.xpose.msra.mxu0 0.0
    %250 = vmatprep.subr.mxu0 0.0
    %251 = vmatpush1.xpose.msra.mxu0 0.0
    %252 = vmatprep.subr.mxu0 0.0
    %253 = vmatpush1.xpose.msra.mxu0 0.0
    %254 = vmatprep.subr.mxu0 0.0
    %255 = vmatpush1.xpose.msra.mxu0 0.0
    %256 = vmatprep.subr.mxu0 0.0
    %257 = vmatpush1.xpose.msra.mxu0 0.0
    %258 = vmatprep.subr.mxu0 0.0
    %259 = vmatpush1.xpose.msra.mxu0 0.0
    %260 = vmatprep.subr.mxu0 0.0
    %261 = vmatpush1.xpose.msra.mxu0 0.0
    %262 = vmatprep.subr.mxu0 0.0
    %263 = vmatpush1.xpose.msra.mxu0 0.0
    %264 = vmatprep.subr.mxu0 0.0
    %265 = vmatpush1.xpose.msra.mxu0 0.0
    %266 = vmatprep.subr.mxu0 0.0
    %267 = vmatpush1.xpose.msra.mxu0 0.0
    %268 = vmatprep.subr.mxu0 0.0
    %269 = vmatpush1.xpose.msra.mxu0 0.0
    %270 = vmatprep.subr.mxu0 0.0
    %271 = vmatpush1.xpose.msra.mxu0 0.0
    %272 = vmatprep.subr.mxu0 0.0
    %273 = vmatpush1.xpose.msra.mxu0 0.0
    %274 = vmatprep.subr.mxu0 0.0
    %275 = vmatpush1.xpose.msra.mxu0 0.0
    %276 = vmatprep.mubr.f32.mxu0 0.0
    %277 = vmatmul.mubr.f32.gmra.mrb[0].mxu0 %v208
    %v278 = vpop.f32.mrb[0].mxu0
    %v279 = vadd.f32 0.0, %v278
    %v280 = vpop.f32.mrb[0].mxu0
    %281 = vdwg.mxu0
    %v282 = vmul.f32 %v202, 0.35355338
    %v283 = vmul.f32 %v279, 0.35355338
    %vm284 = vcmp.gt.f32.partialorder %v32, 0.0
    %vm285 = vcmp.gt.f32.partialorder %v33, 0.0
    %v286 = vsel %vm284, %v282, -1e+09
    %v287 = vsel %vm285, %v283, -1e+09
    %v288 = vsel %vm130, %v286, -inf
    %289 = vmax.xlane.f32.xlu0 %v288
    %v290 = vpop.xlane.xlu0 %289
    %v291 = vsel %vm130, %v287, -inf
    %292 = vmax.xlane.f32.xlu0 %v291
    %v293 = vpop.xlane.xlu0 %292
    %v294 = vsub.f32 %v286, %v290
    %v295 = vsub.f32 %v287, %v293
    %v296 = vmul.f32 %v294, 1.442695
    %v297 = vpow.pop %v296
    %v298 = vmul.f32 %v295, 1.442695
    %v299 = vpow.pop %v298
    %v300 = vsel %vm130, %v297, 0.0
    %301 = vadd.xlane.f32.xlu0 %v300
    %v302 = vpop.xlane.xlu0 %301
    %v303 = vsel %vm130, %v299, 0.0
    %304 = vadd.xlane.f32.xlu0 %v303
    %v305 = vpop.xlane.xlu0 %304
    %v306 = vrcp.pop %v302
    %v307 = vrcp.pop %v305
    %v308 = vmul.f32 %v297, %v306
    %v309 = vmul.f32 %v299, %v307
    %310 = vrot.lane.b32.xlu0 %v119, 64
    %v311 = vpop.permute.xlu0 %310
    %v314 = vsel %vm130, %v308, 0
    %316 = vmatprep.subr.mxu0 0.0
    %317 = vmatpush1.msra.mxu0 %v311
    %318 = vmatprep.subr.mxu0 0.0
    %319 = vmatpush1.msra.mxu0 0.0
    %320 = vmatprep.subr.mxu0 0.0
    %321 = vmatpush1.msra.mxu0 0.0
    %322 = vmatprep.subr.mxu0 0.0
    %323 = vmatpush1.msra.mxu0 0.0
    %324 = vmatprep.subr.mxu0 0.0
    %325 = vmatpush1.msra.mxu0 0.0
    %326 = vmatprep.subr.mxu0 0.0
    %327 = vmatpush1.msra.mxu0 0.0
    %328 = vmatprep.subr.mxu0 0.0
    %329 = vmatpush1.msra.mxu0 0.0
    %330 = vmatprep.subr.mxu0 0.0
    %331 = vmatpush1.msra.mxu0 0.0
    %332 = vmatprep.subr.mxu0 0.0
    %333 = vmatpush1.msra.mxu0 0.0
    %334 = vmatprep.subr.mxu0 0.0
    %335 = vmatpush1.msra.mxu0 0.0
    %336 = vmatprep.subr.mxu0 0.0
    %337 = vmatpush1.msra.mxu0 0.0
    %338 = vmatprep.subr.mxu0 0.0
    %339 = vmatpush1.msra.mxu0 0.0
    %340 = vmatprep.subr.mxu0 0.0
    %341 = vmatpush1.msra.mxu0 0.0
    %342 = vmatprep.subr.mxu0 0.0
    %343 = vmatpush1.msra.mxu0 0.0
    %344 = vmatprep.subr.mxu0 0.0
    %345 = vmatpush1.msra.mxu0 0.0
    %346 = vmatprep.subr.mxu0 0.0
    %347 = vmatpush1.msra.mxu0 0.0
    %348 = vmatprep.subr.mxu0 0.0
    %349 = vmatpush1.msra.mxu0 0.0
    %350 = vmatprep.subr.mxu0 0.0
    %351 = vmatpush1.msra.mxu0 0.0
    %352 = vmatprep.subr.mxu0 0.0
    %353 = vmatpush1.msra.mxu0 0.0
    %354 = vmatprep.subr.mxu0 0.0
    %355 = vmatpush1.msra.mxu0 0.0
    %356 = vmatprep.subr.mxu0 0.0
    %357 = vmatpush1.msra.mxu0 0.0
    %358 = vmatprep.subr.mxu0 0.0
    %359 = vmatpush1.msra.mxu0 0.0
    %360 = vmatprep.subr.mxu0 0.0
    %361 = vmatpush1.msra.mxu0 0.0
    %362 = vmatprep.subr.mxu0 0.0
    %363 = vmatpush1.msra.mxu0 0.0
    %364 = vmatprep.subr.mxu0 0.0
    %365 = vmatpush1.msra.mxu0 0.0
    %366 = vmatprep.subr.mxu0 0.0
    %367 = vmatpush1.msra.mxu0 0.0
    %368 = vmatprep.subr.mxu0 0.0
    %369 = vmatpush1.msra.mxu0 0.0
    %370 = vmatprep.subr.mxu0 0.0
    %371 = vmatpush1.msra.mxu0 0.0
    %372 = vmatprep.subr.mxu0 0.0
    %373 = vmatpush1.msra.mxu0 0.0
    %374 = vmatprep.subr.mxu0 0.0
    %375 = vmatpush1.msra.mxu0 0.0
    %376 = vmatprep.subr.mxu0 0.0
    %377 = vmatpush1.msra.mxu0 0.0
    %378 = vmatprep.subr.mxu0 0.0
    %379 = vmatpush1.msra.mxu0 0.0
    %380 = vmatprep.mubr.f32.mxu0 0.0
    %381 = vmatmul.mubr.f32.gmra.mrb[0].mxu0 %v314
    %v382 = vpop.f32.mrb[0].mxu0
    %v383 = vadd.f32 0.0, %v382
    %v384 = vpop.f32.mrb[0].mxu0
    %385 = vdwg.mxu0
    %386 = vrot.lane.b32.xlu0 %v124, 64
    %v387 = vpop.permute.xlu0 %386
    %v390 = vsel %vm130, %v309, 0
    %392 = vmatprep.subr.mxu0 0.0
    %393 = vmatpush1.msra.mxu0 %v387
    %394 = vmatprep.subr.mxu0 0.0
    %395 = vmatpush1.msra.mxu0 0.0
    %396 = vmatprep.subr.mxu0 0.0
    %397 = vmatpush1.msra.mxu0 0.0
    %398 = vmatprep.subr.mxu0 0.0
    %399 = vmatpush1.msra.mxu0 0.0
    %400 = vmatprep.subr.mxu0 0.0
    %401 = vmatpush1.msra.mxu0 0.0
    %402 = vmatprep.subr.mxu0 0.0
    %403 = vmatpush1.msra.mxu0 0.0
    %404 = vmatprep.subr.mxu0 0.0
    %405 = vmatpush1.msra.mxu0 0.0
    %406 = vmatprep.subr.mxu0 0.0
    %407 = vmatpush1.msra.mxu0 0.0
    %408 = vmatprep.subr.mxu0 0.0
    %409 = vmatpush1.msra.mxu0 0.0
    %410 = vmatprep.subr.mxu0 0.0
    %411 = vmatpush1.msra.mxu0 0.0
    %412 = vmatprep.subr.mxu0 0.0
    %413 = vmatpush1.msra.mxu0 0.0
    %414 = vmatprep.subr.mxu0 0.0
    %415 = vmatpush1.msra.mxu0 0.0
    %416 = vmatprep.subr.mxu0 0.0
    %417 = vmatpush1.msra.mxu0 0.0
    %418 = vmatprep.subr.mxu0 0.0
    %419 = vmatpush1.msra.mxu0 0.0
    %420 = vmatprep.subr.mxu0 0.0
    %421 = vmatpush1.msra.mxu0 0.0
    %422 = vmatprep.subr.mxu0 0.0
    %423 = vmatpush1.msra.mxu0 0.0
    %424 = vmatprep.subr.mxu0 0.0
    %425 = vmatpush1.msra.mxu0 0.0
    %426 = vmatprep.subr.mxu0 0.0
    %427 = vmatpush1.msra.mxu0 0.0
    %428 = vmatprep.subr.mxu0 0.0
    %429 = vmatpush1.msra.mxu0 0.0
    %430 = vmatprep.subr.mxu0 0.0
    %431 = vmatpush1.msra.mxu0 0.0
    %432 = vmatprep.subr.mxu0 0.0
    %433 = vmatpush1.msra.mxu0 0.0
    %434 = vmatprep.subr.mxu0 0.0
    %435 = vmatpush1.msra.mxu0 0.0
    %436 = vmatprep.subr.mxu0 0.0
    %437 = vmatpush1.msra.mxu0 0.0
    %438 = vmatprep.subr.mxu0 0.0
    %439 = vmatpush1.msra.mxu0 0.0
    %440 = vmatprep.subr.mxu0 0.0
    %441 = vmatpush1.msra.mxu0 0.0
    %442 = vmatprep.subr.mxu0 0.0
    %443 = vmatpush1.msra.mxu0 0.0
    %444 = vmatprep.subr.mxu0 0.0
    %445 = vmatpush1.msra.mxu0 0.0
    %446 = vmatprep.subr.mxu0 0.0
    %447 = vmatpush1.msra.mxu0 0.0
    %448 = vmatprep.subr.mxu0 0.0
    %449 = vmatpush1.msra.mxu0 0.0
    %450 = vmatprep.subr.mxu0 0.0
    %451 = vmatpush1.msra.mxu0 0.0
    %452 = vmatprep.subr.mxu0 0.0
    %453 = vmatpush1.msra.mxu0 0.0
    %454 = vmatprep.subr.mxu0 0.0
    %455 = vmatpush1.msra.mxu0 0.0
    %456 = vmatprep.mubr.f32.mxu0 0.0
    %457 = vmatmul.mubr.f32.gmra.mrb[0].mxu0 %v390
    %v458 = vpop.f32.mrb[0].mxu0
    %v459 = vadd.f32 0.0, %v458
    %v460 = vpop.f32.mrb[0].mxu0
    %461 = vdwg.mxu0
    %462 = vrot.lane.b32.xlu0 %v119, 120
    %v463 = vpop.permute.xlu0 %462
    %464 = vrot.lane.b32.xlu0 %v119, 88
    %v465 = vpop.permute.xlu0 %464
    %v466 = vsel %vm130, %v463, 0
    %v468 = vsel %vm130, %v465, 0
    %470 = vmatprep.subr.mxu0 0.0
    %471 = vmatpush1.xpose.msra.mxu0 %v468
    %472 = vmatprep.subr.mxu0 0.0
    %473 = vmatpush1.xpose.msra.mxu0 0.0
    %474 = vmatprep.subr.mxu0 0.0
    %475 = vmatpush1.xpose.msra.mxu0 0.0
    %476 = vmatprep.subr.mxu0 0.0
    %477 = vmatpush1.xpose.msra.mxu0 0.0
    %478 = vmatprep.subr.mxu0 0.0
    %479 = vmatpush1.xpose.msra.mxu0 0.0
    %480 = vmatprep.subr.mxu0 0.0
    %481 = vmatpush1.xpose.msra.mxu0 0.0
    %482 = vmatprep.subr.mxu0 0.0
    %483 = vmatpush1.xpose.msra.mxu0 0.0
    %484 = vmatprep.subr.mxu0 0.0
    %485 = vmatpush1.xpose.msra.mxu0 0.0
    %486 = vmatprep.subr.mxu0 0.0
    %487 = vmatpush1.xpose.msra.mxu0 0.0
    %488 = vmatprep.subr.mxu0 0.0
    %489 = vmatpush1.xpose.msra.mxu0 0.0
    %490 = vmatprep.subr.mxu0 0.0
    %491 = vmatpush1.xpose.msra.mxu0 0.0
    %492 = vmatprep.subr.mxu0 0.0
    %493 = vmatpush1.xpose.msra.mxu0 0.0
    %494 = vmatprep.subr.mxu0 0.0
    %495 = vmatpush1.xpose.msra.mxu0 0.0
    %496 = vmatprep.subr.mxu0 0.0
    %497 = vmatpush1.xpose.msra.mxu0 0.0
    %498 = vmatprep.subr.mxu0 0.0
    %499 = vmatpush1.xpose.msra.mxu0 0.0
    %500 = vmatprep.subr.mxu0 0.0
    %501 = vmatpush1.xpose.msra.mxu0 0.0
    %502 = vmatprep.subr.mxu0 0.0
    %503 = vmatpush1.xpose.msra.mxu0 0.0
    %504 = vmatprep.subr.mxu0 0.0
    %505 = vmatpush1.xpose.msra.mxu0 0.0
    %506 = vmatprep.subr.mxu0 0.0
    %507 = vmatpush1.xpose.msra.mxu0 0.0
    %508 = vmatprep.subr.mxu0 0.0
    %509 = vmatpush1.xpose.msra.mxu0 0.0
    %510 = vmatprep.subr.mxu0 0.0
    %511 = vmatpush1.xpose.msra.mxu0 0.0
    %512 = vmatprep.subr.mxu0 0.0
    %513 = vmatpush1.xpose.msra.mxu0 0.0
    %514 = vmatprep.subr.mxu0 0.0
    %515 = vmatpush1.xpose.msra.mxu0 0.0
    %516 = vmatprep.subr.mxu0 0.0
    %517 = vmatpush1.xpose.msra.mxu0 0.0
    %518 = vmatprep.subr.mxu0 0.0
    %519 = vmatpush1.xpose.msra.mxu0 0.0
    %520 = vmatprep.subr.mxu0 0.0
    %521 = vmatpush1.xpose.msra.mxu0 0.0
    %522 = vmatprep.subr.mxu0 0.0
    %523 = vmatpush1.xpose.msra.mxu0 0.0
    %524 = vmatprep.subr.mxu0 0.0
    %525 = vmatpush1.xpose.msra.mxu0 0.0
    %526 = vmatprep.subr.mxu0 0.0
    %527 = vmatpush1.xpose.msra.mxu0 0.0
    %528 = vmatprep.subr.mxu0 0.0
    %529 = vmatpush1.xpose.msra.mxu0 0.0
    %530 = vmatprep.subr.mxu0 0.0
    %531 = vmatpush1.xpose.msra.mxu0 0.0
    %532 = vmatprep.subr.mxu0 0.0
    %533 = vmatpush1.xpose.msra.mxu0 0.0
    %534 = vmatprep.mubr.f32.mxu0 0.0
    %535 = vmatmul.mubr.f32.gmra.mrb[0].mxu0 %v466
    %v536 = vpop.f32.mrb[0].mxu0
    %v537 = vadd.f32 0.0, %v536
    %v538 = vpop.f32.mrb[0].mxu0
    %539 = vdwg.mxu0
    %540 = vrot.lane.b32.xlu0 %v124, 120
    %v541 = vpop.permute.xlu0 %540
    %542 = vrot.lane.b32.xlu0 %v124, 88
    %v543 = vpop.permute.xlu0 %542
    %v544 = vsel %vm130, %v541, 0
    %v546 = vsel %vm130, %v543, 0
    %548 = vmatprep.subr.mxu0 0.0
    %549 = vmatpush1.xpose.msra.mxu0 %v546
    %550 = vmatprep.subr.mxu0 0.0
    %551 = vmatpush1.xpose.msra.mxu0 0.0
    %552 = vmatprep.subr.mxu0 0.0
    %553 = vmatpush1.xpose.msra.mxu0 0.0
    %554 = vmatprep.subr.mxu0 0.0
    %555 = vmatpush1.xpose.msra.mxu0 0.0
    %556 = vmatprep.subr.mxu0 0.0
    %557 = vmatpush1.xpose.msra.mxu0 0.0
    %558 = vmatprep.subr.mxu0 0.0
    %559 = vmatpush1.xpose.msra.mxu0 0.0
    %560 = vmatprep.subr.mxu0 0.0
    %561 = vmatpush1.xpose.msra.mxu0 0.0
    %562 = vmatprep.subr.mxu0 0.0
    %563 = vmatpush1.xpose.msra.mxu0 0.0
    %564 = vmatprep.subr.mxu0 0.0
    %565 = vmatpush1.xpose.msra.mxu0 0.0
    %566 = vmatprep.subr.mxu0 0.0
    %567 = vmatpush1.xpose.msra.mxu0 0.0
    %568 = vmatprep.subr.mxu0 0.0
    %569 = vmatpush1.xpose.msra.mxu0 0.0
    %570 = vmatprep.subr.mxu0 0.0
    %571 = vmatpush1.xpose.msra.mxu0 0.0
    %572 = vmatprep.subr.mxu0 0.0
    %573 = vmatpush1.xpose.msra.mxu0 0.0
    %574 = vmatprep.subr.mxu0 0.0
    %575 = vmatpush1.xpose.msra.mxu0 0.0
    %576 = vmatprep.subr.mxu0 0.0
    %577 = vmatpush1.xpose.msra.mxu0 0.0
    %578 = vmatprep.subr.mxu0 0.0
    %579 = vmatpush1.xpose.msra.mxu0 0.0
    %580 = vmatprep.subr.mxu0 0.0
    %581 = vmatpush1.xpose.msra.mxu0 0.0
    %582 = vmatprep.subr.mxu0 0.0
    %583 = vmatpush1.xpose.msra.mxu0 0.0
    %584 = vmatprep.subr.mxu0 0.0
    %585 = vmatpush1.xpose.msra.mxu0 0.0
    %586 = vmatprep.subr.mxu0 0.0
    %587 = vmatpush1.xpose.msra.mxu0 0.0
    %588 = vmatprep.subr.mxu0 0.0
    %589 = vmatpush1.xpose.msra.mxu0 0.0
    %590 = vmatprep.subr.mxu0 0.0
    %591 = vmatpush1.xpose.msra.mxu0 0.0
    %592 = vmatprep.subr.mxu0 0.0
    %593 = vmatpush1.xpose.msra.mxu0 0.0
    %594 = vmatprep.subr.mxu0 0.0
    %595 = vmatpush1.xpose.msra.mxu0 0.0
    %596 = vmatprep.subr.mxu0 0.0
    %597 = vmatpush1.xpose.msra.mxu0 0.0
    %598 = vmatprep.subr.mxu0 0.0
    %599 = vmatpush1.xpose.msra.mxu0 0.0
    %600 = vmatprep.subr.mxu0 0.0
    %601 = vmatpush1.xpose.msra.mxu0 0.0
    %602 = vmatprep.subr.mxu0 0.0
    %603 = vmatpush1.xpose.msra.mxu0 0.0
    %604 = vmatprep.subr.mxu0 0.0
    %605 = vmatpush1.xpose.msra.mxu0 0.0
    %606 = vmatprep.subr.mxu0 0.0
    %607 = vmatpush1.xpose.msra.mxu0 0.0
    %608 = vmatprep.subr.mxu0 0.0
    %609 = vmatpush1.xpose.msra.mxu0 0.0
    %610 = vmatprep.subr.mxu0 0.0
    %611 = vmatpush1.xpose.msra.mxu0 0.0
    %612 = vmatprep.mubr.f32.mxu0 0.0
    %613 = vmatmul.mubr.f32.gmra.mrb[0].mxu0 %v544
    %v614 = vpop.f32.mrb[0].mxu0
    %v615 = vadd.f32 0.0, %v614
    %v616 = vpop.f32.mrb[0].mxu0
    %617 = vdwg.mxu0
    %v618 = vmul.f32 %v537, 0.35355338
    %v619 = vmul.f32 %v615, 0.35355338
    %v620 = vsel %vm284, %v618, -1e+09
    %v621 = vsel %vm285, %v619, -1e+09
    %v622 = vsel %vm130, %v620, -inf
    %623 = vmax.xlane.f32.xlu0 %v622
    %v624 = vpop.xlane.xlu0 %623
    %v625 = vsel %vm130, %v621, -inf
    %626 = vmax.xlane.f32.xlu0 %v625
    %v627 = vpop.xlane.xlu0 %626
    %v628 = vsub.f32 %v620, %v624
    %v629 = vsub.f32 %v621, %v627
    %v630 = vmul.f32 %v628, 1.442695
    %v631 = vpow.pop %v630
    %v632 = vmul.f32 %v629, 1.442695
    %v633 = vpow.pop %v632
    %v634 = vsel %vm130, %v631, 0.0
    %635 = vadd.xlane.f32.xlu0 %v634
    %v636 = vpop.xlane.xlu0 %635
    %v637 = vsel %vm130, %v633, 0.0
    %638 = vadd.xlane.f32.xlu0 %v637
    %v639 = vpop.xlane.xlu0 %638
    %v640 = vrcp.pop %v636
    %v641 = vrcp.pop %v639
    %v642 = vmul.f32 %v631, %v640
    %v643 = vmul.f32 %v633, %v641
    %644 = vrot.lane.b32.xlu0 %v119, 56
    %v645 = vpop.permute.xlu0 %644
    %v648 = vsel %vm130, %v642, 0
    %650 = vmatprep.subr.mxu0 0.0
    %651 = vmatpush1.msra.mxu0 %v645
    %652 = vmatprep.subr.mxu0 0.0
    %653 = vmatpush1.msra.mxu0 0.0
    %654 = vmatprep.subr.mxu0 0.0
    %655 = vmatpush1.msra.mxu0 0.0
    %656 = vmatprep.subr.mxu0 0.0
    %657 = vmatpush1.msra.mxu0 0.0
    %658 = vmatprep.subr.mxu0 0.0
    %659 = vmatpush1.msra.mxu0 0.0
    %660 = vmatprep.subr.mxu0 0.0
    %661 = vmatpush1.msra.mxu0 0.0
    %662 = vmatprep.subr.mxu0 0.0
    %663 = vmatpush1.msra.mxu0 0.0
    %664 = vmatprep.subr.mxu0 0.0
    %665 = vmatpush1.msra.mxu0 0.0
    %666 = vmatprep.subr.mxu0 0.0
    %667 = vmatpush1.msra.mxu0 0.0
    %668 = vmatprep.subr.mxu0 0.0
    %669 = vmatpush1.msra.mxu0 0.0
    %670 = vmatprep.subr.mxu0 0.0
    %671 = vmatpush1.msra.mxu0 0.0
    %672 = vmatprep.subr.mxu0 0.0
    %673 = vmatpush1.msra.mxu0 0.0
    %674 = vmatprep.subr.mxu0 0.0
    %675 = vmatpush1.msra.mxu0 0.0
    %676 = vmatprep.subr.mxu0 0.0
    %677 = vmatpush1.msra.mxu0 0.0
    %678 = vmatprep.subr.mxu0 0.0
    %679 = vmatpush1.msra.mxu0 0.0
    %680 = vmatprep.subr.mxu0 0.0
    %681 = vmatpush1.msra.mxu0 0.0
    %682 = vmatprep.subr.mxu0 0.0
    %683 = vmatpush1.msra.mxu0 0.0
    %684 = vmatprep.subr.mxu0 0.0
    %685 = vmatpush1.msra.mxu0 0.0
    %686 = vmatprep.subr.mxu0 0.0
    %687 = vmatpush1.msra.mxu0 0.0
    %688 = vmatprep.subr.mxu0 0.0
    %689 = vmatpush1.msra.mxu0 0.0
    %690 = vmatprep.subr.mxu0 0.0
    %691 = vmatpush1.msra.mxu0 0.0
    %692 = vmatprep.subr.mxu0 0.0
    %693 = vmatpush1.msra.mxu0 0.0
    %694 = vmatprep.subr.mxu0 0.0
    %695 = vmatpush1.msra.mxu0 0.0
    %696 = vmatprep.subr.mxu0 0.0
    %697 = vmatpush1.msra.mxu0 0.0
    %698 = vmatprep.subr.mxu0 0.0
    %699 = vmatpush1.msra.mxu0 0.0
    %700 = vmatprep.subr.mxu0 0.0
    %701 = vmatpush1.msra.mxu0 0.0
    %702 = vmatprep.subr.mxu0 0.0
    %703 = vmatpush1.msra.mxu0 0.0
    %704 = vmatprep.subr.mxu0 0.0
    %705 = vmatpush1.msra.mxu0 0.0
    %706 = vmatprep.subr.mxu0 0.0
    %707 = vmatpush1.msra.mxu0 0.0
    %708 = vmatprep.subr.mxu0 0.0
    %709 = vmatpush1.msra.mxu0 0.0
    %710 = vmatprep.subr.mxu0 0.0
    %711 = vmatpush1.msra.mxu0 0.0
    %712 = vmatprep.subr.mxu0 0.0
    %713 = vmatpush1.msra.mxu0 0.0
    %714 = vmatprep.mubr.f32.mxu0 0.0
    %715 = vmatmul.mubr.f32.gmra.mrb[0].mxu0 %v648
    %v716 = vpop.f32.mrb[0].mxu0
    %v717 = vadd.f32 0.0, %v716
    %v718 = vpop.f32.mrb[0].mxu0
    %719 = vdwg.mxu0
    %720 = vrot.lane.b32.xlu0 %v124, 56
    %v721 = vpop.permute.xlu0 %720
    %v724 = vsel %vm130, %v643, 0
    %726 = vmatprep.subr.mxu0 0.0
    %727 = vmatpush1.msra.mxu0 %v721
    %728 = vmatprep.subr.mxu0 0.0
    %729 = vmatpush1.msra.mxu0 0.0
    %730 = vmatprep.subr.mxu0 0.0
    %731 = vmatpush1.msra.mxu0 0.0
    %732 = vmatprep.subr.mxu0 0.0
    %733 = vmatpush1.msra.mxu0 0.0
    %734 = vmatprep.subr.mxu0 0.0
    %735 = vmatpush1.msra.mxu0 0.0
    %736 = vmatprep.subr.mxu0 0.0
    %737 = vmatpush1.msra.mxu0 0.0
    %738 = vmatprep.subr.mxu0 0.0
    %739 = vmatpush1.msra.mxu0 0.0
    %740 = vmatprep.subr.mxu0 0.0
    %741 = vmatpush1.msra.mxu0 0.0
    %742 = vmatprep.subr.mxu0 0.0
    %743 = vmatpush1.msra.mxu0 0.0
    %744 = vmatprep.subr.mxu0 0.0
    %745 = vmatpush1.msra.mxu0 0.0
    %746 = vmatprep.subr.mxu0 0.0
    %747 = vmatpush1.msra.mxu0 0.0
    %748 = vmatprep.subr.mxu0 0.0
    %749 = vmatpush1.msra.mxu0 0.0
    %750 = vmatprep.subr.mxu0 0.0
    %751 = vmatpush1.msra.mxu0 0.0
    %752 = vmatprep.subr.mxu0 0.0
    %753 = vmatpush1.msra.mxu0 0.0
    %754 = vmatprep.subr.mxu0 0.0
    %755 = vmatpush1.msra.mxu0 0.0
    %756 = vmatprep.subr.mxu0 0.0
    %757 = vmatpush1.msra.mxu0 0.0
    %758 = vmatprep.subr.mxu0 0.0
    %759 = vmatpush1.msra.mxu0 0.0
    %760 = vmatprep.subr.mxu0 0.0
    %761 = vmatpush1.msra.mxu0 0.0
    %762 = vmatprep.subr.mxu0 0.0
    %763 = vmatpush1.msra.mxu0 0.0
    %764 = vmatprep.subr.mxu0 0.0
    %765 = vmatpush1.msra.mxu0 0.0
    %766 = vmatprep.subr.mxu0 0.0
    %767 = vmatpush1.msra.mxu0 0.0
    %768 = vmatprep.subr.mxu0 0.0
    %769 = vmatpush1.msra.mxu0 0.0
    %770 = vmatprep.subr.mxu0 0.0
    %771 = vmatpush1.msra.mxu0 0.0
    %772 = vmatprep.subr.mxu0 0.0
    %773 = vmatpush1.msra.mxu0 0.0
    %774 = vmatprep.subr.mxu0 0.0
    %775 = vmatpush1.msra.mxu0 0.0
    %776 = vmatprep.subr.mxu0 0.0
    %777 = vmatpush1.msra.mxu0 0.0
    %778 = vmatprep.subr.mxu0 0.0
    %779 = vmatpush1.msra.mxu0 0.0
    %780 = vmatprep.subr.mxu0 0.0
    %781 = vmatpush1.msra.mxu0 0.0
    %782 = vmatprep.subr.mxu0 0.0
    %783 = vmatpush1.msra.mxu0 0.0
    %784 = vmatprep.subr.mxu0 0.0
    %785 = vmatpush1.msra.mxu0 0.0
    %786 = vmatprep.subr.mxu0 0.0
    %787 = vmatpush1.msra.mxu0 0.0
    %788 = vmatprep.subr.mxu0 0.0
    %789 = vmatpush1.msra.mxu0 0.0
    %790 = vmatprep.mubr.f32.mxu0 0.0
    %791 = vmatmul.mubr.f32.gmra.mrb[0].mxu0 %v724
    %v792 = vpop.f32.mrb[0].mxu0
    %v793 = vadd.f32 0.0, %v792
    %v794 = vpop.f32.mrb[0].mxu0
    %795 = vdwg.mxu0
    %797 = vrot.lane.b32.xlu0 %v35, 32
    %v798 = vpop.permute.xlu0 %797
    %v801 = vsel %vm130, %v717, 0
    %v804 = vsel %vm130, %v793, 0
    %806 = vmatprep.subr.mxu0 0.0
    %807 = vmatpush1.msra.mxu0 %v798
    %808 = vmatprep.subr.mxu0 0.0
    %809 = vmatpush1.msra.mxu0 0.0
    %810 = vmatprep.subr.mxu0 0.0
    %811 = vmatpush1.msra.mxu0 0.0
    %812 = vmatprep.subr.mxu0 0.0
    %813 = vmatpush1.msra.mxu0 0.0
    %814 = vmatprep.subr.mxu0 0.0
    %815 = vmatpush1.msra.mxu0 0.0
    %816 = vmatprep.subr.mxu0 0.0
    %817 = vmatpush1.msra.mxu0 0.0
    %818 = vmatprep.subr.mxu0 0.0
    %819 = vmatpush1.msra.mxu0 0.0
    %820 = vmatprep.subr.mxu0 0.0
    %821 = vmatpush1.msra.mxu0 0.0
    %822 = vmatprep.subr.mxu0 0.0
    %823 = vmatpush1.msra.mxu0 0.0
    %824 = vmatprep.subr.mxu0 0.0
    %825 = vmatpush1.msra.mxu0 0.0
    %826 = vmatprep.subr.mxu0 0.0
    %827 = vmatpush1.msra.mxu0 0.0
    %828 = vmatprep.subr.mxu0 0.0
    %829 = vmatpush1.msra.mxu0 0.0
    %830 = vmatprep.subr.mxu0 0.0
    %831 = vmatpush1.msra.mxu0 0.0
    %832 = vmatprep.subr.mxu0 0.0
    %833 = vmatpush1.msra.mxu0 0.0
    %834 = vmatprep.subr.mxu0 0.0
    %835 = vmatpush1.msra.mxu0 0.0
    %836 = vmatprep.subr.mxu0 0.0
    %837 = vmatpush1.msra.mxu0 0.0
    %838 = vmatprep.subr.mxu0 0.0
    %839 = vmatpush1.msra.mxu0 0.0
    %840 = vmatprep.subr.mxu0 0.0
    %841 = vmatpush1.msra.mxu0 0.0
    %842 = vmatprep.subr.mxu0 0.0
    %843 = vmatpush1.msra.mxu0 0.0
    %844 = vmatprep.subr.mxu0 0.0
    %845 = vmatpush1.msra.mxu0 0.0
    %846 = vmatprep.subr.mxu0 0.0
    %847 = vmatpush1.msra.mxu0 0.0
    %848 = vmatprep.subr.mxu0 0.0
    %849 = vmatpush1.msra.mxu0 0.0
    %850 = vmatprep.subr.mxu0 0.0
    %851 = vmatpush1.msra.mxu0 0.0
    %852 = vmatprep.subr.mxu0 0.0
    %853 = vmatpush1.msra.mxu0 0.0
    %854 = vmatprep.subr.mxu0 0.0
    %855 = vmatpush1.msra.mxu0 0.0
    %856 = vmatprep.subr.mxu0 0.0
    %857 = vmatpush1.msra.mxu0 0.0
    %858 = vmatprep.subr.mxu0 0.0
    %859 = vmatpush1.msra.mxu0 0.0
    %860 = vmatprep.subr.mxu0 0.0
    %861 = vmatpush1.msra.mxu0 0.0
    %862 = vmatprep.subr.mxu0 0.0
    %863 = vmatpush1.msra.mxu0 0.0
    %864 = vmatprep.subr.mxu0 0.0
    %865 = vmatpush1.msra.mxu0 0.0
    %866 = vmatprep.subr.mxu0 0.0
    %867 = vmatpush1.msra.mxu0 0.0
    %868 = vmatprep.subr.mxu0 0.0
    %869 = vmatpush1.msra.mxu0 0.0
    %870 = vmatprep.mubr.f32.mxu0 0.0
    %871 = vmatmul.mubr.f32.gmra.mrb[0].mxu0 %v801
    %v872 = vpop.f32.mrb[0].mxu0
    %v873 = vadd.f32 0.0, %v872
    %v874 = vpop.f32.mrb[0].mxu0
    %875 = vmatprep.mubr.f32.mxu0 0.0
    %876 = vmatmul.mubr.f32.gmra.mrb[0].mxu0 %v804
    %v877 = vpop.f32.mrb[0].mxu0
    %v878 = vadd.f32 0.0, %v877
    %v879 = vpop.f32.mrb[0].mxu0
    %880 = vdwg.mxu0
    %882 = vrot.lane.b32.xlu0 %v34, 32
    %v883 = vpop.permute.xlu0 %882
    %v886 = vsel %vm130, %v383, 0
    %v889 = vsel %vm130, %v459, 0
    %891 = vmatprep.subr.mxu0 0.0
    %892 = vmatpush1.msra.mxu0 %v883
    %893 = vmatprep.subr.mxu0 0.0
    %894 = vmatpush1.msra.mxu0 0.0
    %895 = vmatprep.subr.mxu0 0.0
    %896 = vmatpush1.msra.mxu0 0.0
    %897 = vmatprep.subr.mxu0 0.0
    %898 = vmatpush1.msra.mxu0 0.0
    %899 = vmatprep.subr.mxu0 0.0
    %900 = vmatpush1.msra.mxu0 0.0
    %901 = vmatprep.subr.mxu0 0.0
    %902 = vmatpush1.msra.mxu0 0.0
    %903 = vmatprep.subr.mxu0 0.0
    %904 = vmatpush1.msra.mxu0 0.0
    %905 = vmatprep.subr.mxu0 0.0
    %906 = vmatpush1.msra.mxu0 0.0
    %907 = vmatprep.subr.mxu0 0.0
    %908 = vmatpush1.msra.mxu0 0.0
    %909 = vmatprep.subr.mxu0 0.0
    %910 = vmatpush1.msra.mxu0 0.0
    %911 = vmatprep.subr.mxu0 0.0
    %912 = vmatpush1.msra.mxu0 0.0
    %913 = vmatprep.subr.mxu0 0.0
    %914 = vmatpush1.msra.mxu0 0.0
    %915 = vmatprep.subr.mxu0 0.0
    %916 = vmatpush1.msra.mxu0 0.0
    %917 = vmatprep.subr.mxu0 0.0
    %918 = vmatpush1.msra.mxu0 0.0
    %919 = vmatprep.subr.mxu0 0.0
    %920 = vmatpush1.msra.mxu0 0.0
    %921 = vmatprep.subr.mxu0 0.0
    %922 = vmatpush1.msra.mxu0 0.0
    %923 = vmatprep.subr.mxu0 0.0
    %924 = vmatpush1.msra.mxu0 0.0
    %925 = vmatprep.subr.mxu0 0.0
    %926 = vmatpush1.msra.mxu0 0.0
    %927 = vmatprep.subr.mxu0 0.0
    %928 = vmatpush1.msra.mxu0 0.0
    %929 = vmatprep.subr.mxu0 0.0
    %930 = vmatpush1.msra.mxu0 0.0
    %931 = vmatprep.subr.mxu0 0.0
    %932 = vmatpush1.msra.mxu0 0.0
    %933 = vmatprep.subr.mxu0 0.0
    %934 = vmatpush1.msra.mxu0 0.0
    %935 = vmatprep.subr.mxu0 0.0
    %936 = vmatpush1.msra.mxu0 0.0
    %937 = vmatprep.subr.mxu0 0.0
    %938 = vmatpush1.msra.mxu0 0.0
    %939 = vmatprep.subr.mxu0 0.0
    %940 = vmatpush1.msra.mxu0 0.0
    %941 = vmatprep.subr.mxu0 0.0
    %942 = vmatpush1.msra.mxu0 0.0
    %943 = vmatprep.subr.mxu0 0.0
    %944 = vmatpush1.msra.mxu0 0.0
    %945 = vmatprep.subr.mxu0 0.0
    %946 = vmatpush1.msra.mxu0 0.0
    %947 = vmatprep.subr.mxu0 0.0
    %948 = vmatpush1.msra.mxu0 0.0
    %949 = vmatprep.subr.mxu0 0.0
    %950 = vmatpush1.msra.mxu0 0.0
    %951 = vmatprep.subr.mxu0 0.0
    %952 = vmatpush1.msra.mxu0 0.0
    %953 = vmatprep.subr.mxu0 0.0
    %954 = vmatpush1.msra.mxu0 0.0
    %955 = vmatprep.mubr.f32.mxu0 0.0
    %956 = vmatmul.mubr.f32.gmra.mrb[0].mxu0 %v886
    %v957 = vpop.f32.mrb[0].mxu0
    %v958 = vadd.f32 %v873, %v957
    %v959 = vpop.f32.mrb[0].mxu0
    %960 = vmatprep.mubr.f32.mxu0 0.0
    %961 = vmatmul.mubr.f32.gmra.mrb[0].mxu0 %v889
    %v962 = vpop.f32.mrb[0].mxu0
    %v963 = vadd.f32 %v878, %v962
    %v964 = vpop.f32.mrb[0].mxu0
    %965 = vdwg.mxu0
    %966 = vrot.lane.b32.xlu0 %v119, 112
    %v967 = vpop.permute.xlu0 %966
    %968 = vrot.lane.b32.xlu0 %v119, 80
    %v969 = vpop.permute.xlu0 %968
    %v970 = vsel %vm130, %v967, 0
    %v972 = vsel %vm130, %v969, 0
    %974 = vmatprep.subr.mxu0 0.0
    %975 = vmatpush1.xpose.msra.mxu0 %v972
    %976 = vmatprep.subr.mxu0 0.0
    %977 = vmatpush1.xpose.msra.mxu0 0.0
    %978 = vmatprep.subr.mxu0 0.0
    %979 = vmatpush1.xpose.msra.mxu0 0.0
    %980 = vmatprep.subr.mxu0 0.0
    %981 = vmatpush1.xpose.msra.mxu0 0.0
    %982 = vmatprep.subr.mxu0 0.0
    %983 = vmatpush1.xpose.msra.mxu0 0.0
    %984 = vmatprep.subr.mxu0 0.0
    %985 = vmatpush1.xpose.msra.mxu0 0.0
    %986 = vmatprep.subr.mxu0 0.0
    %987 = vmatpush1.xpose.msra.mxu0 0.0
    %988 = vmatprep.subr.mxu0 0.0
    %989 = vmatpush1.xpose.msra.mxu0 0.0
    %990 = vmatprep.subr.mxu0 0.0
    %991 = vmatpush1.xpose.msra.mxu0 0.0
    %992 = vmatprep.subr.mxu0 0.0
    %993 = vmatpush1.xpose.msra.mxu0 0.0
    %994 = vmatprep.subr.mxu0 0.0
    %995 = vmatpush1.xpose.msra.mxu0 0.0
    %996 = vmatprep.subr.mxu0 0.0
    %997 = vmatpush1.xpose.msra.mxu0 0.0
    %998 = vmatprep.subr.mxu0 0.0
    %999 = vmatpush1.xpose.msra.mxu0 0.0
    %1000 = vmatprep.subr.mxu0 0.0
    %1001 = vmatpush1.xpose.msra.mxu0 0.0
    %1002 = vmatprep.subr.mxu0 0.0
    %1003 = vmatpush1.xpose.msra.mxu0 0.0
    %1004 = vmatprep.subr.mxu0 0.0
    %1005 = vmatpush1.xpose.msra.mxu0 0.0
    %1006 = vmatprep.subr.mxu0 0.0
    %1007 = vmatpush1.xpose.msra.mxu0 0.0
    %1008 = vmatprep.subr.mxu0 0.0
    %1009 = vmatpush1.xpose.msra.mxu0 0.0
    %1010 = vmatprep.subr.mxu0 0.0
    %1011 = vmatpush1.xpose.msra.mxu0 0.0
    %1012 = vmatprep.subr.mxu0 0.0
    %1013 = vmatpush1.xpose.msra.mxu0 0.0
    %1014 = vmatprep.subr.mxu0 0.0
    %1015 = vmatpush1.xpose.msra.mxu0 0.0
    %1016 = vmatprep.subr.mxu0 0.0
    %1017 = vmatpush1.xpose.msra.mxu0 0.0
    %1018 = vmatprep.subr.mxu0 0.0
    %1019 = vmatpush1.xpose.msra.mxu0 0.0
    %1020 = vmatprep.subr.mxu0 0.0
    %1021 = vmatpush1.xpose.msra.mxu0 0.0
    %1022 = vmatprep.subr.mxu0 0.0
    %1023 = vmatpush1.xpose.msra.mxu0 0.0
    %1024 = vmatprep.subr.mxu0 0.0
    %1025 = vmatpush1.xpose.msra.mxu0 0.0
    %1026 = vmatprep.subr.mxu0 0.0
    %1027 = vmatpush1.xpose.msra.mxu0 0.0
    %1028 = vmatprep.subr.mxu0 0.0
    %1029 = vmatpush1.xpose.msra.mxu0 0.0
    %1030 = vmatprep.subr.mxu0 0.0
    %1031 = vmatpush1.xpose.msra.mxu0 0.0
    %1032 = vmatprep.subr.mxu0 0.0
    %1033 = vmatpush1.xpose.msra.mxu0 0.0
    %1034 = vmatprep.subr.mxu0 0.0
    %1035 = vmatpush1.xpose.msra.mxu0 0.0
    %1036 = vmatprep.subr.mxu0 0.0
    %1037 = vmatpush1.xpose.msra.mxu0 0.0
    %1038 = vmatprep.mubr.f32.mxu0 0.0
    %1039 = vmatmul.mubr.f32.gmra.mrb[0].mxu0 %v970
    %v1040 = vpop.f32.mrb[0].mxu0
    %v1041 = vadd.f32 0.0, %v1040
    %v1042 = vpop.f32.mrb[0].mxu0
    %1043 = vdwg.mxu0
    %1044 = vrot.lane.b32.xlu0 %v124, 112
    %v1045 = vpop.permute.xlu0 %1044
    %1046 = vrot.lane.b32.xlu0 %v124, 80
    %v1047 = vpop.permute.xlu0 %1046
    %v1048 = vsel %vm130, %v1045, 0
    %v1050 = vsel %vm130, %v1047, 0
    %1052 = vmatprep.subr.mxu0 0.0
    %1053 = vmatpush1.xpose.msra.mxu0 %v1050
    %1054 = vmatprep.subr.mxu0 0.0
    %1055 = vmatpush1.xpose.msra.mxu0 0.0
    %1056 = vmatprep.subr.mxu0 0.0
    %1057 = vmatpush1.xpose.msra.mxu0 0.0
    %1058 = vmatprep.subr.mxu0 0.0
    %1059 = vmatpush1.xpose.msra.mxu0 0.0
    %1060 = vmatprep.subr.mxu0 0.0
    %1061 = vmatpush1.xpose.msra.mxu0 0.0
    %1062 = vmatprep.subr.mxu0 0.0
    %1063 = vmatpush1.xpose.msra.mxu0 0.0
    %1064 = vmatprep.subr.mxu0 0.0
    %1065 = vmatpush1.xpose.msra.mxu0 0.0
    %1066 = vmatprep.subr.mxu0 0.0
    %1067 = vmatpush1.xpose.msra.mxu0 0.0
    %1068 = vmatprep.subr.mxu0 0.0
    %1069 = vmatpush1.xpose.msra.mxu0 0.0
    %1070 = vmatprep.subr.mxu0 0.0
    %1071 = vmatpush1.xpose.msra.mxu0 0.0
    %1072 = vmatprep.subr.mxu0 0.0
    %1073 = vmatpush1.xpose.msra.mxu0 0.0
    %1074 = vmatprep.subr.mxu0 0.0
    %1075 = vmatpush1.xpose.msra.mxu0 0.0
    %1076 = vmatprep.subr.mxu0 0.0
    %1077 = vmatpush1.xpose.msra.mxu0 0.0
    %1078 = vmatprep.subr.mxu0 0.0
    %1079 = vmatpush1.xpose.msra.mxu0 0.0
    %1080 = vmatprep.subr.mxu0 0.0
    %1081 = vmatpush1.xpose.msra.mxu0 0.0
    %1082 = vmatprep.subr.mxu0 0.0
    %1083 = vmatpush1.xpose.msra.mxu0 0.0
    %1084 = vmatprep.subr.mxu0 0.0
    %1085 = vmatpush1.xpose.msra.mxu0 0.0
    %1086 = vmatprep.subr.mxu0 0.0
    %1087 = vmatpush1.xpose.msra.mxu0 0.0
    %1088 = vmatprep.subr.mxu0 0.0
    %1089 = vmatpush1.xpose.msra.mxu0 0.0
    %1090 = vmatprep.subr.mxu0 0.0
    %1091 = vmatpush1.xpose.msra.mxu0 0.0
    %1092 = vmatprep.subr.mxu0 0.0
    %1093 = vmatpush1.xpose.msra.mxu0 0.0
    %1094 = vmatprep.subr.mxu0 0.0
    %1095 = vmatpush1.xpose.msra.mxu0 0.0
    %1096 = vmatprep.subr.mxu0 0.0
    %1097 = vmatpush1.xpose.msra.mxu0 0.0
    %1098 = vmatprep.subr.mxu0 0.0
    %1099 = vmatpush1.xpose.msra.mxu0 0.0
    %1100 = vmatprep.subr.mxu0 0.0
    %1101 = vmatpush1.xpose.msra.mxu0 0.0
    %1102 = vmatprep.subr.mxu0 0.0
    %1103 = vmatpush1.xpose.msra.mxu0 0.0
    %1104 = vmatprep.subr.mxu0 0.0
    %1105 = vmatpush1.xpose.msra.mxu0 0.0
    %1106 = vmatprep.subr.mxu0 0.0
    %1107 = vmatpush1.xpose.msra.mxu0 0.0
    %1108 = vmatprep.subr.mxu0 0.0
    %1109 = vmatpush1.xpose.msra.mxu0 0.0
    %1110 = vmatprep.subr.mxu0 0.0
    %1111 = vmatpush1.xpose.msra.mxu0 0.0
    %1112 = vmatprep.subr.mxu0 0.0
    %1113 = vmatpush1.xpose.msra.mxu0 0.0
    %1114 = vmatprep.subr.mxu0 0.0
    %1115 = vmatpush1.xpose.msra.mxu0 0.0
    %1116 = vmatprep.mubr.f32.mxu0 0.0
    %1117 = vmatmul.mubr.f32.gmra.mrb[0].mxu0 %v1048
    %v1118 = vpop.f32.mrb[0].mxu0
    %v1119 = vadd.f32 0.0, %v1118
    %v1120 = vpop.f32.mrb[0].mxu0
    %1121 = vdwg.mxu0
    %v1122 = vmul.f32 %v1041, 0.35355338
    %v1123 = vmul.f32 %v1119, 0.35355338
    %v1124 = vsel %vm284, %v1122, -1e+09
    %v1125 = vsel %vm285, %v1123, -1e+09
    %v1126 = vsel %vm130, %v1124, -inf
    %1127 = vmax.xlane.f32.xlu0 %v1126
    %v1128 = vpop.xlane.xlu0 %1127
    %v1129 = vsel %vm130, %v1125, -inf
    %1130 = vmax.xlane.f32.xlu0 %v1129
    %v1131 = vpop.xlane.xlu0 %1130
    %v1132 = vsub.f32 %v1124, %v1128
    %v1133 = vsub.f32 %v1125, %v1131
    %v1134 = vmul.f32 %v1132, 1.442695
    %v1135 = vpow.pop %v1134
    %v1136 = vmul.f32 %v1133, 1.442695
    %v1137 = vpow.pop %v1136
    %v1138 = vsel %vm130, %v1135, 0.0
    %1139 = vadd.xlane.f32.xlu0 %v1138
    %v1140 = vpop.xlane.xlu0 %1139
    %v1141 = vsel %vm130, %v1137, 0.0
    %1142 = vadd.xlane.f32.xlu0 %v1141
    %v1143 = vpop.xlane.xlu0 %1142
    %v1144 = vrcp.pop %v1140
    %v1145 = vrcp.pop %v1143
    %v1146 = vmul.f32 %v1135, %v1144
    %v1147 = vmul.f32 %v1137, %v1145
    %1148 = vrot.lane.b32.xlu0 %v119, 48
    %v1149 = vpop.permute.xlu0 %1148
    %v1152 = vsel %vm130, %v1146, 0
    %1154 = vmatprep.subr.mxu0 0.0
    %1155 = vmatpush1.msra.mxu0 %v1149
    %1156 = vmatprep.subr.mxu0 0.0
    %1157 = vmatpush1.msra.mxu0 0.0
    %1158 = vmatprep.subr.mxu0 0.0
    %1159 = vmatpush1.msra.mxu0 0.0
    %1160 = vmatprep.subr.mxu0 0.0
    %1161 = vmatpush1.msra.mxu0 0.0
    %1162 = vmatprep.subr.mxu0 0.0
    %1163 = vmatpush1.msra.mxu0 0.0
    %1164 = vmatprep.subr.mxu0 0.0
    %1165 = vmatpush1.msra.mxu0 0.0
    %1166 = vmatprep.subr.mxu0 0.0
    %1167 = vmatpush1.msra.mxu0 0.0
    %1168 = vmatprep.subr.mxu0 0.0
    %1169 = vmatpush1.msra.mxu0 0.0
    %1170 = vmatprep.subr.mxu0 0.0
    %1171 = vmatpush1.msra.mxu0 0.0
    %1172 = vmatprep.subr.mxu0 0.0
    %1173 = vmatpush1.msra.mxu0 0.0
    %1174 = vmatprep.subr.mxu0 0.0
    %1175 = vmatpush1.msra.mxu0 0.0
    %1176 = vmatprep.subr.mxu0 0.0
    %1177 = vmatpush1.msra.mxu0 0.0
    %1178 = vmatprep.subr.mxu0 0.0
    %1179 = vmatpush1.msra.mxu0 0.0
    %1180 = vmatprep.subr.mxu0 0.0
    %1181 = vmatpush1.msra.mxu0 0.0
    %1182 = vmatprep.subr.mxu0 0.0
    %1183 = vmatpush1.msra.mxu0 0.0
    %1184 = vmatprep.subr.mxu0 0.0
    %1185 = vmatpush1.msra.mxu0 0.0
    %1186 = vmatprep.subr.mxu0 0.0
    %1187 = vmatpush1.msra.mxu0 0.0
    %1188 = vmatprep.subr.mxu0 0.0
    %1189 = vmatpush1.msra.mxu0 0.0
    %1190 = vmatprep.subr.mxu0 0.0
    %1191 = vmatpush1.msra.mxu0 0.0
    %1192 = vmatprep.subr.mxu0 0.0
    %1193 = vmatpush1.msra.mxu0 0.0
    %1194 = vmatprep.subr.mxu0 0.0
    %1195 = vmatpush1.msra.mxu0 0.0
    %1196 = vmatprep.subr.mxu0 0.0
    %1197 = vmatpush1.msra.mxu0 0.0
    %1198 = vmatprep.subr.mxu0 0.0
    %1199 = vmatpush1.msra.mxu0 0.0
    %1200 = vmatprep.subr.mxu0 0.0
    %1201 = vmatpush1.msra.mxu0 0.0
    %1202 = vmatprep.subr.mxu0 0.0
    %1203 = vmatpush1.msra.mxu0 0.0
    %1204 = vmatprep.subr.mxu0 0.0
    %1205 = vmatpush1.msra.mxu0 0.0
    %1206 = vmatprep.subr.mxu0 0.0
    %1207 = vmatpush1.msra.mxu0 0.0
    %1208 = vmatprep.subr.mxu0 0.0
    %1209 = vmatpush1.msra.mxu0 0.0
    %1210 = vmatprep.subr.mxu0 0.0
    %1211 = vmatpush1.msra.mxu0 0.0
    %1212 = vmatprep.subr.mxu0 0.0
    %1213 = vmatpush1.msra.mxu0 0.0
    %1214 = vmatprep.subr.mxu0 0.0
    %1215 = vmatpush1.msra.mxu0 0.0
    %1216 = vmatprep.subr.mxu0 0.0
    %1217 = vmatpush1.msra.mxu0 0.0
    %1218 = vmatprep.mubr.f32.mxu0 0.0
    %1219 = vmatmul.mubr.f32.gmra.mrb[0].mxu0 %v1152
    %v1220 = vpop.f32.mrb[0].mxu0
    %v1221 = vadd.f32 0.0, %v1220
    %v1222 = vpop.f32.mrb[0].mxu0
    %1223 = vdwg.mxu0
    %1224 = vrot.lane.b32.xlu0 %v124, 48
    %v1225 = vpop.permute.xlu0 %1224
    %v1228 = vsel %vm130, %v1147, 0
    %1230 = vmatprep.subr.mxu0 0.0
    %1231 = vmatpush1.msra.mxu0 %v1225
    %1232 = vmatprep.subr.mxu0 0.0
    %1233 = vmatpush1.msra.mxu0 0.0
    %1234 = vmatprep.subr.mxu0 0.0
    %1235 = vmatpush1.msra.mxu0 0.0
    %1236 = vmatprep.subr.mxu0 0.0
    %1237 = vmatpush1.msra.mxu0 0.0
    %1238 = vmatprep.subr.mxu0 0.0
    %1239 = vmatpush1.msra.mxu0 0.0
    %1240 = vmatprep.subr.mxu0 0.0
    %1241 = vmatpush1.msra.mxu0 0.0
    %1242 = vmatprep.subr.mxu0 0.0
    %1243 = vmatpush1.msra.mxu0 0.0
    %1244 = vmatprep.subr.mxu0 0.0
    %1245 = vmatpush1.msra.mxu0 0.0
    %1246 = vmatprep.subr.mxu0 0.0
    %1247 = vmatpush1.msra.mxu0 0.0
    %1248 = vmatprep.subr.mxu0 0.0
    %1249 = vmatpush1.msra.mxu0 0.0
    %1250 = vmatprep.subr.mxu0 0.0
    %1251 = vmatpush1.msra.mxu0 0.0
    %1252 = vmatprep.subr.mxu0 0.0
    %1253 = vmatpush1.msra.mxu0 0.0
    %1254 = vmatprep.subr.mxu0 0.0
    %1255 = vmatpush1.msra.mxu0 0.0
    %1256 = vmatprep.subr.mxu0 0.0
    %1257 = vmatpush1.msra.mxu0 0.0
    %1258 = vmatprep.subr.mxu0 0.0
    %1259 = vmatpush1.msra.mxu0 0.0
    %1260 = vmatprep.subr.mxu0 0.0
    %1261 = vmatpush1.msra.mxu0 0.0
    %1262 = vmatprep.subr.mxu0 0.0
    %1263 = vmatpush1.msra.mxu0 0.0
    %1264 = vmatprep.subr.mxu0 0.0
    %1265 = vmatpush1.msra.mxu0 0.0
    %1266 = vmatprep.subr.mxu0 0.0
    %1267 = vmatpush1.msra.mxu0 0.0
    %1268 = vmatprep.subr.mxu0 0.0
    %1269 = vmatpush1.msra.mxu0 0.0
    %1270 = vmatprep.subr.mxu0 0.0
    %1271 = vmatpush1.msra.mxu0 0.0
    %1272 = vmatprep.subr.mxu0 0.0
    %1273 = vmatpush1.msra.mxu0 0.0
    %1274 = vmatprep.subr.mxu0 0.0
    %1275 = vmatpush1.msra.mxu0 0.0
    %1276 = vmatprep.subr.mxu0 0.0
    %1277 = vmatpush1.msra.mxu0 0.0
    %1278 = vmatprep.subr.mxu0 0.0
    %1279 = vmatpush1.msra.mxu0 0.0
    %1280 = vmatprep.subr.mxu0 0.0
    %1281 = vmatpush1.msra.mxu0 0.0
    %1282 = vmatprep.subr.mxu0 0.0
    %1283 = vmatpush1.msra.mxu0 0.0
    %1284 = vmatprep.subr.mxu0 0.0
    %1285 = vmatpush1.msra.mxu0 0.0
    %1286 = vmatprep.subr.mxu0 0.0
    %1287 = vmatpush1.msra.mxu0 0.0
    %1288 = vmatprep.subr.mxu0 0.0
    %1289 = vmatpush1.msra.mxu0 0.0
    %1290 = vmatprep.subr.mxu0 0.0
    %1291 = vmatpush1.msra.mxu0 0.0
    %1292 = vmatprep.subr.mxu0 0.0
    %1293 = vmatpush1.msra.mxu0 0.0
    %1294 = vmatprep.mubr.f32.mxu0 0.0
    %1295 = vmatmul.mubr.f32.gmra.mrb[0].mxu0 %v1228
    %v1296 = vpop.f32.mrb[0].mxu0
    %v1297 = vadd.f32 0.0, %v1296
    %v1298 = vpop.f32.mrb[0].mxu0
    %1299 = vdwg.mxu0
    %1301 = vrot.lane.b32.xlu0 %v36, 32
    %v1302 = vpop.permute.xlu0 %1301
    %v1305 = vsel %vm130, %v1221, 0
    %v1308 = vsel %vm130, %v1297, 0
    %1310 = vmatprep.subr.mxu0 0.0
    %1311 = vmatpush1.msra.mxu0 %v1302
    %1312 = vmatprep.subr.mxu0 0.0
    %1313 = vmatpush1.msra.mxu0 0.0
    %1314 = vmatprep.subr.mxu0 0.0
    %1315 = vmatpush1.msra.mxu0 0.0
    %1316 = vmatprep.subr.mxu0 0.0
    %1317 = vmatpush1.msra.mxu0 0.0
    %1318 = vmatprep.subr.mxu0 0.0
    %1319 = vmatpush1.msra.mxu0 0.0
    %1320 = vmatprep.subr.mxu0 0.0
    %1321 = vmatpush1.msra.mxu0 0.0
    %1322 = vmatprep.subr.mxu0 0.0
    %1323 = vmatpush1.msra.mxu0 0.0
    %1324 = vmatprep.subr.mxu0 0.0
    %1325 = vmatpush1.msra.mxu0 0.0
    %1326 = vmatprep.subr.mxu0 0.0
    %1327 = vmatpush1.msra.mxu0 0.0
    %1328 = vmatprep.subr.mxu0 0.0
    %1329 = vmatpush1.msra.mxu0 0.0
    %1330 = vmatprep.subr.mxu0 0.0
    %1331 = vmatpush1.msra.mxu0 0.0
    %1332 = vmatprep.subr.mxu0 0.0
    %1333 = vmatpush1.msra.mxu0 0.0
    %1334 = vmatprep.subr.mxu0 0.0
    %1335 = vmatpush1.msra.mxu0 0.0
    %1336 = vmatprep.subr.mxu0 0.0
    %1337 = vmatpush1.msra.mxu0 0.0
    %1338 = vmatprep.subr.mxu0 0.0
    %1339 = vmatpush1.msra.mxu0 0.0
    %1340 = vmatprep.subr.mxu0 0.0
    %1341 = vmatpush1.msra.mxu0 0.0
    %1342 = vmatprep.subr.mxu0 0.0
    %1343 = vmatpush1.msra.mxu0 0.0
    %1344 = vmatprep.subr.mxu0 0.0
    %1345 = vmatpush1.msra.mxu0 0.0
    %1346 = vmatprep.subr.mxu0 0.0
    %1347 = vmatpush1.msra.mxu0 0.0
    %1348 = vmatprep.subr.mxu0 0.0
    %1349 = vmatpush1.msra.mxu0 0.0
    %1350 = vmatprep.subr.mxu0 0.0
    %1351 = vmatpush1.msra.mxu0 0.0
    %1352 = vmatprep.subr.mxu0 0.0
    %1353 = vmatpush1.msra.mxu0 0.0
    %1354 = vmatprep.subr.mxu0 0.0
    %1355 = vmatpush1.msra.mxu0 0.0
    %1356 = vmatprep.subr.mxu0 0.0
    %1357 = vmatpush1.msra.mxu0 0.0
    %1358 = vmatprep.subr.mxu0 0.0
    %1359 = vmatpush1.msra.mxu0 0.0
    %1360 = vmatprep.subr.mxu0 0.0
    %1361 = vmatpush1.msra.mxu0 0.0
    %1362 = vmatprep.subr.mxu0 0.0
    %1363 = vmatpush1.msra.mxu0 0.0
    %1364 = vmatprep.subr.mxu0 0.0
    %1365 = vmatpush1.msra.mxu0 0.0
    %1366 = vmatprep.subr.mxu0 0.0
    %1367 = vmatpush1.msra.mxu0 0.0
    %1368 = vmatprep.subr.mxu0 0.0
    %1369 = vmatpush1.msra.mxu0 0.0
    %1370 = vmatprep.subr.mxu0 0.0
    %1371 = vmatpush1.msra.mxu0 0.0
    %1372 = vmatprep.subr.mxu0 0.0
    %1373 = vmatpush1.msra.mxu0 0.0
    %1374 = vmatprep.mubr.f32.mxu0 0.0
    %1375 = vmatmul.mubr.f32.gmra.mrb[0].mxu0 %v1305
    %v1376 = vpop.f32.mrb[0].mxu0
    %v1377 = vadd.f32 0.0, %v1376
    %v1378 = vpop.f32.mrb[0].mxu0
    %1379 = vmatprep.mubr.f32.mxu0 0.0
    %1380 = vmatmul.mubr.f32.gmra.mrb[0].mxu0 %v1308
    %v1381 = vpop.f32.mrb[0].mxu0
    %v1382 = vadd.f32 0.0, %v1381
    %v1383 = vpop.f32.mrb[0].mxu0
    %1384 = vdwg.mxu0
    %v1385 = vadd.f32 %v958, %v1377
    %v1386 = vadd.f32 %v963, %v1382
    %1387 = vrot.lane.b32.xlu0 %v119, 104
    %v1388 = vpop.permute.xlu0 %1387
    %1389 = vrot.lane.b32.xlu0 %v119, 72
    %v1390 = vpop.permute.xlu0 %1389
    %v1391 = vsel %vm130, %v1388, 0
    %v1393 = vsel %vm130, %v1390, 0
    %1395 = vmatprep.subr.mxu0 0.0
    %1396 = vmatpush1.xpose.msra.mxu0 %v1393
    %1397 = vmatprep.subr.mxu0 0.0
    %1398 = vmatpush1.xpose.msra.mxu0 0.0
    %1399 = vmatprep.subr.mxu0 0.0
    %1400 = vmatpush1.xpose.msra.mxu0 0.0
    %1401 = vmatprep.subr.mxu0 0.0
    %1402 = vmatpush1.xpose.msra.mxu0 0.0
    %1403 = vmatprep.subr.mxu0 0.0
    %1404 = vmatpush1.xpose.msra.mxu0 0.0
    %1405 = vmatprep.subr.mxu0 0.0
    %1406 = vmatpush1.xpose.msra.mxu0 0.0
    %1407 = vmatprep.subr.mxu0 0.0
    %1408 = vmatpush1.xpose.msra.mxu0 0.0
    %1409 = vmatprep.subr.mxu0 0.0
    %1410 = vmatpush1.xpose.msra.mxu0 0.0
    %1411 = vmatprep.subr.mxu0 0.0
    %1412 = vmatpush1.xpose.msra.mxu0 0.0
    %1413 = vmatprep.subr.mxu0 0.0
    %1414 = vmatpush1.xpose.msra.mxu0 0.0
    %1415 = vmatprep.subr.mxu0 0.0
    %1416 = vmatpush1.xpose.msra.mxu0 0.0
    %1417 = vmatprep.subr.mxu0 0.0
    %1418 = vmatpush1.xpose.msra.mxu0 0.0
    %1419 = vmatprep.subr.mxu0 0.0
    %1420 = vmatpush1.xpose.msra.mxu0 0.0
    %1421 = vmatprep.subr.mxu0 0.0
    %1422 = vmatpush1.xpose.msra.mxu0 0.0
    %1423 = vmatprep.subr.mxu0 0.0
    %1424 = vmatpush1.xpose.msra.mxu0 0.0
    %1425 = vmatprep.subr.mxu0 0.0
    %1426 = vmatpush1.xpose.msra.mxu0 0.0
    %1427 = vmatprep.subr.mxu0 0.0
    %1428 = vmatpush1.xpose.msra.mxu0 0.0
    %1429 = vmatprep.subr.mxu0 0.0
    %1430 = vmatpush1.xpose.msra.mxu0 0.0
    %1431 = vmatprep.subr.mxu0 0.0
    %1432 = vmatpush1.xpose.msra.mxu0 0.0
    %1433 = vmatprep.subr.mxu0 0.0
    %1434 = vmatpush1.xpose.msra.mxu0 0.0
    %1435 = vmatprep.subr.mxu0 0.0
    %1436 = vmatpush1.xpose.msra.mxu0 0.0
    %1437 = vmatprep.subr.mxu0 0.0
    %1438 = vmatpush1.xpose.msra.mxu0 0.0
    %1439 = vmatprep.subr.mxu0 0.0
    %1440 = vmatpush1.xpose.msra.mxu0 0.0
    %1441 = vmatprep.subr.mxu0 0.0
    %1442 = vmatpush1.xpose.msra.mxu0 0.0
    %1443 = vmatprep.subr.mxu0 0.0
    %1444 = vmatpush1.xpose.msra.mxu0 0.0
    %1445 = vmatprep.subr.mxu0 0.0
    %1446 = vmatpush1.xpose.msra.mxu0 0.0
    %1447 = vmatprep.subr.mxu0 0.0
    %1448 = vmatpush1.xpose.msra.mxu0 0.0
    %1449 = vmatprep.subr.mxu0 0.0
    %1450 = vmatpush1.xpose.msra.mxu0 0.0
    %1451 = vmatprep.subr.mxu0 0.0
    %1452 = vmatpush1.xpose.msra.mxu0 0.0
    %1453 = vmatprep.subr.mxu0 0.0
    %1454 = vmatpush1.xpose.msra.mxu0 0.0
    %1455 = vmatprep.subr.mxu0 0.0
    %1456 = vmatpush1.xpose.msra.mxu0 0.0
    %1457 = vmatprep.subr.mxu0 0.0
    %1458 = vmatpush1.xpose.msra.mxu0 0.0
    %1459 = vmatprep.mubr.f32.mxu0 0.0
    %1460 = vmatmul.mubr.f32.gmra.mrb[0].mxu0 %v1391
    %v1461 = vpop.f32.mrb[0].mxu0
    %v1462 = vadd.f32 0.0, %v1461
    %v1463 = vpop.f32.mrb[0].mxu0
    %1464 = vdwg.mxu0
    %1465 = vrot.lane.b32.xlu0 %v124, 104
    %v1466 = vpop.permute.xlu0 %1465
    %1467 = vrot.lane.b32.xlu0 %v124, 72
    %v1468 = vpop.permute.xlu0 %1467
    %v1469 = vsel %vm130, %v1466, 0
    %v1471 = vsel %vm130, %v1468, 0
    %1473 = vmatprep.subr.mxu0 0.0
    %1474 = vmatpush1.xpose.msra.mxu0 %v1471
    %1475 = vmatprep.subr.mxu0 0.0
    %1476 = vmatpush1.xpose.msra.mxu0 0.0
    %1477 = vmatprep.subr.mxu0 0.0
    %1478 = vmatpush1.xpose.msra.mxu0 0.0
    %1479 = vmatprep.subr.mxu0 0.0
    %1480 = vmatpush1.xpose.msra.mxu0 0.0
    %1481 = vmatprep.subr.mxu0 0.0
    %1482 = vmatpush1.xpose.msra.mxu0 0.0
    %1483 = vmatprep.subr.mxu0 0.0
    %1484 = vmatpush1.xpose.msra.mxu0 0.0
    %1485 = vmatprep.subr.mxu0 0.0
    %1486 = vmatpush1.xpose.msra.mxu0 0.0
    %1487 = vmatprep.subr.mxu0 0.0
    %1488 = vmatpush1.xpose.msra.mxu0 0.0
    %1489 = vmatprep.subr.mxu0 0.0
    %1490 = vmatpush1.xpose.msra.mxu0 0.0
    %1491 = vmatprep.subr.mxu0 0.0
    %1492 = vmatpush1.xpose.msra.mxu0 0.0
    %1493 = vmatprep.subr.mxu0 0.0
    %1494 = vmatpush1.xpose.msra.mxu0 0.0
    %1495 = vmatprep.subr.mxu0 0.0
    %1496 = vmatpush1.xpose.msra.mxu0 0.0
    %1497 = vmatprep.subr.mxu0 0.0
    %1498 = vmatpush1.xpose.msra.mxu0 0.0
    %1499 = vmatprep.subr.mxu0 0.0
    %1500 = vmatpush1.xpose.msra.mxu0 0.0
    %1501 = vmatprep.subr.mxu0 0.0
    %1502 = vmatpush1.xpose.msra.mxu0 0.0
    %1503 = vmatprep.subr.mxu0 0.0
    %1504 = vmatpush1.xpose.msra.mxu0 0.0
    %1505 = vmatprep.subr.mxu0 0.0
    %1506 = vmatpush1.xpose.msra.mxu0 0.0
    %1507 = vmatprep.subr.mxu0 0.0
    %1508 = vmatpush1.xpose.msra.mxu0 0.0
    %1509 = vmatprep.subr.mxu0 0.0
    %1510 = vmatpush1.xpose.msra.mxu0 0.0
    %1511 = vmatprep.subr.mxu0 0.0
    %1512 = vmatpush1.xpose.msra.mxu0 0.0
    %1513 = vmatprep.subr.mxu0 0.0
    %1514 = vmatpush1.xpose.msra.mxu0 0.0
    %1515 = vmatprep.subr.mxu0 0.0
    %1516 = vmatpush1.xpose.msra.mxu0 0.0
    %1517 = vmatprep.subr.mxu0 0.0
    %1518 = vmatpush1.xpose.msra.mxu0 0.0
    %1519 = vmatprep.subr.mxu0 0.0
    %1520 = vmatpush1.xpose.msra.mxu0 0.0
    %1521 = vmatprep.subr.mxu0 0.0
    %1522 = vmatpush1.xpose.msra.mxu0 0.0
    %1523 = vmatprep.subr.mxu0 0.0
    %1524 = vmatpush1.xpose.msra.mxu0 0.0
    %1525 = vmatprep.subr.mxu0 0.0
    %1526 = vmatpush1.xpose.msra.mxu0 0.0
    %1527 = vmatprep.subr.mxu0 0.0
    %1528 = vmatpush1.xpose.msra.mxu0 0.0
    %1529 = vmatprep.subr.mxu0 0.0
    %1530 = vmatpush1.xpose.msra.mxu0 0.0
    %1531 = vmatprep.subr.mxu0 0.0
    %1532 = vmatpush1.xpose.msra.mxu0 0.0
    %1533 = vmatprep.subr.mxu0 0.0
    %1534 = vmatpush1.xpose.msra.mxu0 0.0
    %1535 = vmatprep.subr.mxu0 0.0
    %1536 = vmatpush1.xpose.msra.mxu0 0.0
    %1537 = vmatprep.mubr.f32.mxu0 0.0
    %1538 = vmatmul.mubr.f32.gmra.mrb[0].mxu0 %v1469
    %v1539 = vpop.f32.mrb[0].mxu0
    %v1540 = vadd.f32 0.0, %v1539
    %v1541 = vpop.f32.mrb[0].mxu0
    %1542 = vdwg.mxu0
    %v1543 = vmul.f32 %v1462, 0.35355338
    %v1544 = vmul.f32 %v1540, 0.35355338
    %v1545 = vsel %vm284, %v1543, -1e+09
    %v1546 = vsel %vm285, %v1544, -1e+09
    %v1547 = vsel %vm130, %v1545, -inf
    %1548 = vmax.xlane.f32.xlu0 %v1547
    %v1549 = vpop.xlane.xlu0 %1548
    %v1550 = vsel %vm130, %v1546, -inf
    %1551 = vmax.xlane.f32.xlu0 %v1550
    %v1552 = vpop.xlane.xlu0 %1551
    %v1553 = vsub.f32 %v1545, %v1549
    %v1554 = vsub.f32 %v1546, %v1552
    %v1555 = vmul.f32 %v1553, 1.442695
    %v1556 = vpow.pop %v1555
    %v1557 = vmul.f32 %v1554, 1.442695
    %v1558 = vpow.pop %v1557
    %v1559 = vsel %vm130, %v1556, 0.0
    %1560 = vadd.xlane.f32.xlu0 %v1559
    %v1561 = vpop.xlane.xlu0 %1560
    %v1562 = vsel %vm130, %v1558, 0.0
    %1563 = vadd.xlane.f32.xlu0 %v1562
    %v1564 = vpop.xlane.xlu0 %1563
    %v1565 = vrcp.pop %v1561
    %v1566 = vrcp.pop %v1564
    %v1567 = vmul.f32 %v1556, %v1565
    %v1568 = vmul.f32 %v1558, %v1566
    %1569 = vrot.lane.b32.xlu0 %v119, 40
    %v1570 = vpop.permute.xlu0 %1569
    %v1573 = vsel %vm130, %v1567, 0
    %1575 = vmatprep.subr.mxu0 0.0
    %1576 = vmatpush1.msra.mxu0 %v1570
    %1577 = vmatprep.subr.mxu0 0.0
    %1578 = vmatpush1.msra.mxu0 0.0
    %1579 = vmatprep.subr.mxu0 0.0
    %1580 = vmatpush1.msra.mxu0 0.0
    %1581 = vmatprep.subr.mxu0 0.0
    %1582 = vmatpush1.msra.mxu0 0.0
    %1583 = vmatprep.subr.mxu0 0.0
    %1584 = vmatpush1.msra.mxu0 0.0
    %1585 = vmatprep.subr.mxu0 0.0
    %1586 = vmatpush1.msra.mxu0 0.0
    %1587 = vmatprep.subr.mxu0 0.0
    %1588 = vmatpush1.msra.mxu0 0.0
    %1589 = vmatprep.subr.mxu0 0.0
    %1590 = vmatpush1.msra.mxu0 0.0
    %1591 = vmatprep.subr.mxu0 0.0
    %1592 = vmatpush1.msra.mxu0 0.0
    %1593 = vmatprep.subr.mxu0 0.0
    %1594 = vmatpush1.msra.mxu0 0.0
    %1595 = vmatprep.subr.mxu0 0.0
    %1596 = vmatpush1.msra.mxu0 0.0
    %1597 = vmatprep.subr.mxu0 0.0
    %1598 = vmatpush1.msra.mxu0 0.0
    %1599 = vmatprep.subr.mxu0 0.0
    %1600 = vmatpush1.msra.mxu0 0.0
    %1601 = vmatprep.subr.mxu0 0.0
    %1602 = vmatpush1.msra.mxu0 0.0
    %1603 = vmatprep.subr.mxu0 0.0
    %1604 = vmatpush1.msra.mxu0 0.0
    %1605 = vmatprep.subr.mxu0 0.0
    %1606 = vmatpush1.msra.mxu0 0.0
    %1607 = vmatprep.subr.mxu0 0.0
    %1608 = vmatpush1.msra.mxu0 0.0
    %1609 = vmatprep.subr.mxu0 0.0
    %1610 = vmatpush1.msra.mxu0 0.0
    %1611 = vmatprep.subr.mxu0 0.0
    %1612 = vmatpush1.msra.mxu0 0.0
    %1613 = vmatprep.subr.mxu0 0.0
    %1614 = vmatpush1.msra.mxu0 0.0
    %1615 = vmatprep.subr.mxu0 0.0
    %1616 = vmatpush1.msra.mxu0 0.0
    %1617 = vmatprep.subr.mxu0 0.0
    %1618 = vmatpush1.msra.mxu0 0.0
    %1619 = vmatprep.subr.mxu0 0.0
    %1620 = vmatpush1.msra.mxu0 0.0
    %1621 = vmatprep.subr.mxu0 0.0
    %1622 = vmatpush1.msra.mxu0 0.0
    %1623 = vmatprep.subr.mxu0 0.0
    %1624 = vmatpush1.msra.mxu0 0.0
    %1625 = vmatprep.subr.mxu0 0.0
    %1626 = vmatpush1.msra.mxu0 0.0
    %1627 = vmatprep.subr.mxu0 0.0
    %1628 = vmatpush1.msra.mxu0 0.0
    %1629 = vmatprep.subr.mxu0 0.0
    %1630 = vmatpush1.msra.mxu0 0.0
    %1631 = vmatprep.subr.mxu0 0.0
    %1632 = vmatpush1.msra.mxu0 0.0
    %1633 = vmatprep.subr.mxu0 0.0
    %1634 = vmatpush1.msra.mxu0 0.0
    %1635 = vmatprep.subr.mxu0 0.0
    %1636 = vmatpush1.msra.mxu0 0.0
    %1637 = vmatprep.subr.mxu0 0.0
    %1638 = vmatpush1.msra.mxu0 0.0
    %1639 = vmatprep.mubr.f32.mxu0 0.0
    %1640 = vmatmul.mubr.f32.gmra.mrb[0].mxu0 %v1573
    %v1641 = vpop.f32.mrb[0].mxu0
    %v1642 = vadd.f32 0.0, %v1641
    %v1643 = vpop.f32.mrb[0].mxu0
    %1644 = vdwg.mxu0
    %1645 = vrot.lane.b32.xlu0 %v124, 40
    %v1646 = vpop.permute.xlu0 %1645
    %v1649 = vsel %vm130, %v1568, 0
    %1651 = vmatprep.subr.mxu0 0.0
    %1652 = vmatpush1.msra.mxu0 %v1646
    %1653 = vmatprep.subr.mxu0 0.0
    %1654 = vmatpush1.msra.mxu0 0.0
    %1655 = vmatprep.subr.mxu0 0.0
    %1656 = vmatpush1.msra.mxu0 0.0
    %1657 = vmatprep.subr.mxu0 0.0
    %1658 = vmatpush1.msra.mxu0 0.0
    %1659 = vmatprep.subr.mxu0 0.0
    %1660 = vmatpush1.msra.mxu0 0.0
    %1661 = vmatprep.subr.mxu0 0.0
    %1662 = vmatpush1.msra.mxu0 0.0
    %1663 = vmatprep.subr.mxu0 0.0
    %1664 = vmatpush1.msra.mxu0 0.0
    %1665 = vmatprep.subr.mxu0 0.0
    %1666 = vmatpush1.msra.mxu0 0.0
    %1667 = vmatprep.subr.mxu0 0.0
    %1668 = vmatpush1.msra.mxu0 0.0
    %1669 = vmatprep.subr.mxu0 0.0
    %1670 = vmatpush1.msra.mxu0 0.0
    %1671 = vmatprep.subr.mxu0 0.0
    %1672 = vmatpush1.msra.mxu0 0.0
    %1673 = vmatprep.subr.mxu0 0.0
    %1674 = vmatpush1.msra.mxu0 0.0
    %1675 = vmatprep.subr.mxu0 0.0
    %1676 = vmatpush1.msra.mxu0 0.0
    %1677 = vmatprep.subr.mxu0 0.0
    %1678 = vmatpush1.msra.mxu0 0.0
    %1679 = vmatprep.subr.mxu0 0.0
    %1680 = vmatpush1.msra.mxu0 0.0
    %1681 = vmatprep.subr.mxu0 0.0
    %1682 = vmatpush1.msra.mxu0 0.0
    %1683 = vmatprep.subr.mxu0 0.0
    %1684 = vmatpush1.msra.mxu0 0.0
    %1685 = vmatprep.subr.mxu0 0.0
    %1686 = vmatpush1.msra.mxu0 0.0
    %1687 = vmatprep.subr.mxu0 0.0
    %1688 = vmatpush1.msra.mxu0 0.0
    %1689 = vmatprep.subr.mxu0 0.0
    %1690 = vmatpush1.msra.mxu0 0.0
    %1691 = vmatprep.subr.mxu0 0.0
    %1692 = vmatpush1.msra.mxu0 0.0
    %1693 = vmatprep.subr.mxu0 0.0
    %1694 = vmatpush1.msra.mxu0 0.0
    %1695 = vmatprep.subr.mxu0 0.0
    %1696 = vmatpush1.msra.mxu0 0.0
    %1697 = vmatprep.subr.mxu0 0.0
    %1698 = vmatpush1.msra.mxu0 0.0
    %1699 = vmatprep.subr.mxu0 0.0
    %1700 = vmatpush1.msra.mxu0 0.0
    %1701 = vmatprep.subr.mxu0 0.0
    %1702 = vmatpush1.msra.mxu0 0.0
    %1703 = vmatprep.subr.mxu0 0.0
    %1704 = vmatpush1.msra.mxu0 0.0
    %1705 = vmatprep.subr.mxu0 0.0
    %1706 = vmatpush1.msra.mxu0 0.0
    %1707 = vmatprep.subr.mxu0 0.0
    %1708 = vmatpush1.msra.mxu0 0.0
    %1709 = vmatprep.subr.mxu0 0.0
    %1710 = vmatpush1.msra.mxu0 0.0
    %1711 = vmatprep.subr.mxu0 0.0
    %1712 = vmatpush1.msra.mxu0 0.0
    %1713 = vmatprep.subr.mxu0 0.0
    %1714 = vmatpush1.msra.mxu0 0.0
    %1715 = vmatprep.mubr.f32.mxu0 0.0
    %1716 = vmatmul.mubr.f32.gmra.mrb[0].mxu0 %v1649
    %v1717 = vpop.f32.mrb[0].mxu0
    %v1718 = vadd.f32 0.0, %v1717
    %v1719 = vpop.f32.mrb[0].mxu0
    %1720 = vdwg.mxu0
    %1722 = vrot.lane.b32.xlu0 %v37, 32
    %v1723 = vpop.permute.xlu0 %1722
    %v1726 = vsel %vm130, %v1642, 0
    %v1729 = vsel %vm130, %v1718, 0
    %1731 = vmatprep.subr.mxu0 0.0
    %1732 = vmatpush1.msra.mxu0 %v1723
    %1733 = vmatprep.subr.mxu0 0.0
    %1734 = vmatpush1.msra.mxu0 0.0
    %1735 = vmatprep.subr.mxu0 0.0
    %1736 = vmatpush1.msra.mxu0 0.0
    %1737 = vmatprep.subr.mxu0 0.0
    %1738 = vmatpush1.msra.mxu0 0.0
    %1739 = vmatprep.subr.mxu0 0.0
    %1740 = vmatpush1.msra.mxu0 0.0
    %1741 = vmatprep.subr.mxu0 0.0
    %1742 = vmatpush1.msra.mxu0 0.0
    %1743 = vmatprep.subr.mxu0 0.0
    %1744 = vmatpush1.msra.mxu0 0.0
    %1745 = vmatprep.subr.mxu0 0.0
    %1746 = vmatpush1.msra.mxu0 0.0
    %1747 = vmatprep.subr.mxu0 0.0
    %1748 = vmatpush1.msra.mxu0 0.0
    %1749 = vmatprep.subr.mxu0 0.0
    %1750 = vmatpush1.msra.mxu0 0.0
    %1751 = vmatprep.subr.mxu0 0.0
    %1752 = vmatpush1.msra.mxu0 0.0
    %1753 = vmatprep.subr.mxu0 0.0
    %1754 = vmatpush1.msra.mxu0 0.0
    %1755 = vmatprep.subr.mxu0 0.0
    %1756 = vmatpush1.msra.mxu0 0.0
    %1757 = vmatprep.subr.mxu0 0.0
    %1758 = vmatpush1.msra.mxu0 0.0
    %1759 = vmatprep.subr.mxu0 0.0
    %1760 = vmatpush1.msra.mxu0 0.0
    %1761 = vmatprep.subr.mxu0 0.0
    %1762 = vmatpush1.msra.mxu0 0.0
    %1763 = vmatprep.subr.mxu0 0.0
    %1764 = vmatpush1.msra.mxu0 0.0
    %1765 = vmatprep.subr.mxu0 0.0
    %1766 = vmatpush1.msra.mxu0 0.0
    %1767 = vmatprep.subr.mxu0 0.0
    %1768 = vmatpush1.msra.mxu0 0.0
    %1769 = vmatprep.subr.mxu0 0.0
    %1770 = vmatpush1.msra.mxu0 0.0
    %1771 = vmatprep.subr.mxu0 0.0
    %1772 = vmatpush1.msra.mxu0 0.0
    %1773 = vmatprep.subr.mxu0 0.0
    %1774 = vmatpush1.msra.mxu0 0.0
    %1775 = vmatprep.subr.mxu0 0.0
    %1776 = vmatpush1.msra.mxu0 0.0
    %1777 = vmatprep.subr.mxu0 0.0
    %1778 = vmatpush1.msra.mxu0 0.0
    %1779 = vmatprep.subr.mxu0 0.0
    %1780 = vmatpush1.msra.mxu0 0.0
    %1781 = vmatprep.subr.mxu0 0.0
    %1782 = vmatpush1.msra.mxu0 0.0
    %1783 = vmatprep.subr.mxu0 0.0
    %1784 = vmatpush1.msra.mxu0 0.0
    %1785 = vmatprep.subr.mxu0 0.0
    %1786 = vmatpush1.msra.mxu0 0.0
    %1787 = vmatprep.subr.mxu0 0.0
    %1788 = vmatpush1.msra.mxu0 0.0
    %1789 = vmatprep.subr.mxu0 0.0
    %1790 = vmatpush1.msra.mxu0 0.0
    %1791 = vmatprep.subr.mxu0 0.0
    %1792 = vmatpush1.msra.mxu0 0.0
    %1793 = vmatprep.subr.mxu0 0.0
    %1794 = vmatpush1.msra.mxu0 0.0
    %1795 = vmatprep.mubr.f32.mxu0 0.0
    %1796 = vmatmul.mubr.f32.gmra.mrb[0].mxu0 %v1726
    %v1797 = vpop.f32.mrb[0].mxu0
    %v1798 = vadd.f32 0.0, %v1797
    %v1799 = vpop.f32.mrb[0].mxu0
    %1800 = vmatprep.mubr.f32.mxu0 0.0
    %1801 = vmatmul.mubr.f32.gmra.mrb[0].mxu0 %v1729
    %v1802 = vpop.f32.mrb[0].mxu0
    %v1803 = vadd.f32 0.0, %v1802
    %v1804 = vpop.f32.mrb[0].mxu0
    %1805 = vdwg.mxu0
    %v1806 = vadd.f32 %v1385, %v1798
    %v1807 = vadd.f32 %v1386, %v1803
    %1808 = vrot.lane.b32.xlu0 %v43, 32
    %v1809 = vpop.permute.xlu0 %1808
    %v1811 = vadd.f32 %v1806, %v1809
    %v1812 = vadd.f32 %v1807, %v1809
    %v1813 = vld [vmem:[%s7] sm:$0x1]
    %v1814 = vld [vmem:[%s7 + $0x1] sm:$0x1]
    %v1815 = vld [vmem:[%s7 + $0x2] sm:$0x1]
    %v1816 = vld [vmem:[%s7 + $0x3] sm:$0x1]
    %v1817 = vld [vmem:[%s7 + $0x4] sm:$0x1]
    %v1818 = vadd.f32 %v30, %v1811
    %v1819 = vadd.f32 %v31, %v1812
    %v1820 = vsel %vm45, %v1818, 0.0
    %1821 = vadd.xlane.f32.xlu0 %v1820
    %v1822 = vpop.xlane.xlu0 %1821
    %v1823 = vsel %vm45, %v1819, 0.0
    %1824 = vadd.xlane.f32.xlu0 %v1823
    %v1825 = vpop.xlane.xlu0 %1824
    %v1826 = vrcp.pop 32.0
    %v1827 = vmul.f32 %v1822, %v1826
    %v1828 = vmul.f32 %v1825, %v1826
    %v1829 = vsub.f32 %v1818, %v1827
    %v1830 = vsub.f32 %v1819, %v1828
    %v1831 = vmul.f32 %v1829, %v1829
    %v1832 = vmul.f32 %v1830, %v1830
    %v1833 = vsel %vm45, %v1831, 0.0
    %1834 = vadd.xlane.f32.xlu0 %v1833
    %v1835 = vpop.xlane.xlu0 %1834
    %v1836 = vsel %vm45, %v1832, 0.0
    %1837 = vadd.xlane.f32.xlu0 %v1836
    %v1838 = vpop.xlane.xlu0 %1837
    %v1839 = vmul.f32 %v1835, %v1826
    %v1840 = vmul.f32 %v1838, %v1826
    %v1841 = vadd.f32 %v1839, 1e-05
    %v1842 = vadd.f32 %v1840, 1e-05
    %v1843 = vrsqrt.pop %v1841
    %v1844 = vrsqrt.pop %v1842
    %v1845 = vmul.f32 %v1829, %v1843
    %v1846 = vmul.f32 %v1830, %v1844
    %v1847 = vlaneseq
    %v1848 = vshrl.u32 %v1847, 7
    %v1849 = vsub.s32 0, %v1848
    %v1850 = vrot.slane %v1814, %v1849
    %v1851 = vmul.f32 %v1845, %v1850
    %v1852 = vmul.f32 %v1846, %v1850
    %v1853 = vlaneseq
    %v1854 = vshrl.u32 %v1853, 7
    %v1855 = vsub.s32 0, %v1854
    %v1856 = vrot.slane %v1815, %v1855
    %v1857 = vadd.f32 %v1851, %v1856
    %v1858 = vadd.f32 %v1852, %v1856
    %v1859 = vld [vmem:[%s4] sm:$0xff]
    %v1860 = vld [vmem:[%s4 + $0x8] sm:$0xff]
    %v1861 = vld [vmem:[%s4 + $0x10] sm:$0xff]
    %v1862 = vld [vmem:[%s4 + $0x18] sm:$0xff]
    %v1863 = vld [vmem:[%s5] sm:$0x1]
    %v1865 = vlaneseq
    %v1866 = vshrl.u32 %v1865, 7
    %v1867 = vsub.s32 0, %v1866
    %v1868 = vrot.slane %v1863, %v1867
    %v1871 = vsel %vm45, %v1857, 0
    %v1874 = vsel %vm45, %v1858, 0
    %1876 = vmatprep.subr.mxu0 0.0
    %1877 = vmatpush1.msra.mxu0 %v1859
    %1878 = vmatprep.subr.mxu0 0.0
    %1879 = vmatpush1.msra.mxu0 %v1860
    %1880 = vmatprep.subr.mxu0 0.0
    %1881 = vmatpush1.msra.mxu0 %v1861
    %1882 = vmatprep.subr.mxu0 0.0
    %1883 = vmatpush1.msra.mxu0 %v1862
    %1884 = vmatprep.subr.mxu0 0.0
    %1885 = vmatpush1.msra.mxu0 0.0
    %1886 = vmatprep.subr.mxu0 0.0
    %1887 = vmatpush1.msra.mxu0 0.0
    %1888 = vmatprep.subr.mxu0 0.0
    %1889 = vmatpush1.msra.mxu0 0.0
    %1890 = vmatprep.subr.mxu0 0.0
    %1891 = vmatpush1.msra.mxu0 0.0
    %1892 = vmatprep.subr.mxu0 0.0
    %1893 = vmatpush1.msra.mxu0 0.0
    %1894 = vmatprep.subr.mxu0 0.0
    %1895 = vmatpush1.msra.mxu0 0.0
    %1896 = vmatprep.subr.mxu0 0.0
    %1897 = vmatpush1.msra.mxu0 0.0
    %1898 = vmatprep.subr.mxu0 0.0
    %1899 = vmatpush1.msra.mxu0 0.0
    %1900 = vmatprep.subr.mxu0 0.0
    %1901 = vmatpush1.msra.mxu0 0.0
    %1902 = vmatprep.subr.mxu0 0.0
    %1903 = vmatpush1.msra.mxu0 0.0
    %1904 = vmatprep.subr.mxu0 0.0
    %1905 = vmatpush1.msra.mxu0 0.0
    %1906 = vmatprep.subr.mxu0 0.0
    %1907 = vmatpush1.msra.mxu0 0.0
    %1908 = vmatprep.subr.mxu0 0.0
    %1909 = vmatpush1.msra.mxu0 0.0
    %1910 = vmatprep.subr.mxu0 0.0
    %1911 = vmatpush1.msra.mxu0 0.0
    %1912 = vmatprep.subr.mxu0 0.0
    %1913 = vmatpush1.msra.mxu0 0.0
    %1914 = vmatprep.subr.mxu0 0.0
    %1915 = vmatpush1.msra.mxu0 0.0
    %1916 = vmatprep.subr.mxu0 0.0
    %1917 = vmatpush1.msra.mxu0 0.0
    %1918 = vmatprep.subr.mxu0 0.0
    %1919 = vmatpush1.msra.mxu0 0.0
    %1920 = vmatprep.subr.mxu0 0.0
    %1921 = vmatpush1.msra.mxu0 0.0
    %1922 = vmatprep.subr.mxu0 0.0
    %1923 = vmatpush1.msra.mxu0 0.0
    %1924 = vmatprep.subr.mxu0 0.0
    %1925 = vmatpush1.msra.mxu0 0.0
    %1926 = vmatprep.subr.mxu0 0.0
    %1927 = vmatpush1.msra.mxu0 0.0
    %1928 = vmatprep.subr.mxu0 0.0
    %1929 = vmatpush1.msra.mxu0 0.0
    %1930 = vmatprep.subr.mxu0 0.0
    %1931 = vmatpush1.msra.mxu0 0.0
    %1932 = vmatprep.subr.mxu0 0.0
    %1933 = vmatpush1.msra.mxu0 0.0
    %1934 = vmatprep.subr.mxu0 0.0
    %1935 = vmatpush1.msra.mxu0 0.0
    %1936 = vmatprep.subr.mxu0 0.0
    %1937 = vmatpush1.msra.mxu0 0.0
    %1938 = vmatprep.subr.mxu0 0.0
    %1939 = vmatpush1.msra.mxu0 0.0
    %1940 = vmatprep.mubr.f32.mxu0 0.0
    %1941 = vmatmul.mubr.f32.gmra.mrb[0].mxu0 %v1871
    %v1942 = vpop.f32.mrb[0].mxu0
    %v1943 = vadd.f32 %v1868, %v1942
    %v1944 = vpop.f32.mrb[0].mxu0
    %1945 = vmatprep.mubr.f32.mxu0 0.0
    %1946 = vmatmul.mubr.f32.gmra.mrb[0].mxu0 %v1874
    %v1947 = vpop.f32.mrb[0].mxu0
    %v1948 = vadd.f32 %v1868, %v1947
    %v1949 = vpop.f32.mrb[0].mxu0
    %1950 = vdwg.mxu0
    %v1951 = vmax.f32 %v1943, 0.0
    %v1952 = vmax.f32 %v1948, 0.0
    %v1953 = vld [vmem:[%s6] sm:$0xff]
    %v1954 = vld [vmem:[%s6 + $0x8] sm:$0xff]
    %v1955 = vld [vmem:[%s6 + $0x10] sm:$0xff]
    %v1956 = vld [vmem:[%s6 + $0x18] sm:$0xff]
    %v1957 = vld [vmem:[%s6 + $0x20] sm:$0xff]
    %v1958 = vld [vmem:[%s6 + $0x28] sm:$0xff]
    %v1959 = vld [vmem:[%s6 + $0x30] sm:$0xff]
    %v1960 = vld [vmem:[%s6 + $0x38] sm:$0xff]
    %v1961 = vlaneseq
    %v1962 = vshrl.u32 %v1961, 7
    %v1963 = vsub.s32 0, %v1962
    %v1964 = vrot.slane %v1813, %v1963
    %vm1965 = vcmask 523264
    %v1967 = vsel %vm1965, %v1951, 0
    %v1970 = vsel %vm1965, %v1952, 0
    %1972 = vmatprep.subr.mxu0 0.0
    %1973 = vmatpush1.msra.mxu0 %v1953
    %1974 = vmatprep.subr.mxu0 0.0
    %1975 = vmatpush1.msra.mxu0 %v1954
    %1976 = vmatprep.subr.mxu0 0.0
    %1977 = vmatpush1.msra.mxu0 %v1955
    %1978 = vmatprep.subr.mxu0 0.0
    %1979 = vmatpush1.msra.mxu0 %v1956
    %1980 = vmatprep.subr.mxu0 0.0
    %1981 = vmatpush1.msra.mxu0 %v1957
    %1982 = vmatprep.subr.mxu0 0.0
    %1983 = vmatpush1.msra.mxu0 %v1958
    %1984 = vmatprep.subr.mxu0 0.0
    %1985 = vmatpush1.msra.mxu0 %v1959
    %1986 = vmatprep.subr.mxu0 0.0
    %1987 = vmatpush1.msra.mxu0 %v1960
    %1988 = vmatprep.subr.mxu0 0.0
    %1989 = vmatpush1.msra.mxu0 0.0
    %1990 = vmatprep.subr.mxu0 0.0
    %1991 = vmatpush1.msra.mxu0 0.0
    %1992 = vmatprep.subr.mxu0 0.0
    %1993 = vmatpush1.msra.mxu0 0.0
    %1994 = vmatprep.subr.mxu0 0.0
    %1995 = vmatpush1.msra.mxu0 0.0
    %1996 = vmatprep.subr.mxu0 0.0
    %1997 = vmatpush1.msra.mxu0 0.0
    %1998 = vmatprep.subr.mxu0 0.0
    %1999 = vmatpush1.msra.mxu0 0.0
    %2000 = vmatprep.subr.mxu0 0.0
    %2001 = vmatpush1.msra.mxu0 0.0
    %2002 = vmatprep.subr.mxu0 0.0
    %2003 = vmatpush1.msra.mxu0 0.0
    %2004 = vmatprep.subr.mxu0 0.0
    %2005 = vmatpush1.msra.mxu0 0.0
    %2006 = vmatprep.subr.mxu0 0.0
    %2007 = vmatpush1.msra.mxu0 0.0
    %2008 = vmatprep.subr.mxu0 0.0
    %2009 = vmatpush1.msra.mxu0 0.0
    %2010 = vmatprep.subr.mxu0 0.0
    %2011 = vmatpush1.msra.mxu0 0.0
    %2012 = vmatprep.subr.mxu0 0.0
    %2013 = vmatpush1.msra.mxu0 0.0
    %2014 = vmatprep.subr.mxu0 0.0
    %2015 = vmatpush1.msra.mxu0 0.0
    %2016 = vmatprep.subr.mxu0 0.0
    %2017 = vmatpush1.msra.mxu0 0.0
    %2018 = vmatprep.subr.mxu0 0.0
    %2019 = vmatpush1.msra.mxu0 0.0
    %2020 = vmatprep.subr.mxu0 0.0
    %2021 = vmatpush1.msra.mxu0 0.0
    %2022 = vmatprep.subr.mxu0 0.0
    %2023 = vmatpush1.msra.mxu0 0.0
    %2024 = vmatprep.subr.mxu0 0.0
    %2025 = vmatpush1.msra.mxu0 0.0
    %2026 = vmatprep.subr.mxu0 0.0
    %2027 = vmatpush1.msra.mxu0 0.0
    %2028 = vmatprep.subr.mxu0 0.0
    %2029 = vmatpush1.msra.mxu0 0.0
    %2030 = vmatprep.subr.mxu0 0.0
    %2031 = vmatpush1.msra.mxu0 0.0
    %2032 = vmatprep.subr.mxu0 0.0
    %2033 = vmatpush1.msra.mxu0 0.0
    %2034 = vmatprep.subr.mxu0 0.0
    %2035 = vmatpush1.msra.mxu0 0.0
    %2036 = vmatprep.mubr.f32.mxu0 0.0
    %2037 = vmatmul.mubr.f32.gmra.mrb[0].mxu0 %v1967
    %v2038 = vpop.f32.mrb[0].mxu0
    %v2039 = vadd.f32 %v1964, %v2038
    %v2040 = vpop.f32.mrb[0].mxu0
    %2041 = vmatprep.mubr.f32.mxu0 0.0
    %2042 = vmatmul.mubr.f32.gmra.mrb[0].mxu0 %v1970
    %v2043 = vpop.f32.mrb[0].mxu0
    %v2044 = vadd.f32 %v1964, %v2043
    %v2045 = vpop.f32.mrb[0].mxu0
    %2046 = vdwg.mxu0
    %v2047 = vadd.f32 %v1857, %v2039
    %v2048 = vadd.f32 %v1858, %v2044
    %v2049 = vsel %vm45, %v2047, 0.0
    %2050 = vadd.xlane.f32.xlu0 %v2049
    %v2051 = vpop.xlane.xlu0 %2050
    %v2052 = vsel %vm45, %v2048, 0.0
    %2053 = vadd.xlane.f32.xlu0 %v2052
    %v2054 = vpop.xlane.xlu0 %2053
    %v2055 = vmul.f32 %v2051, %v1826
    %v2056 = vmul.f32 %v2054, %v1826
    %v2057 = vsub.f32 %v2047, %v2055
    %v2058 = vsub.f32 %v2048, %v2056
    %v2059 = vmul.f32 %v2057, %v2057
    %v2060 = vmul.f32 %v2058, %v2058
    %v2061 = vsel %vm45, %v2059, 0.0
    %2062 = vadd.xlane.f32.xlu0 %v2061
    %v2063 = vpop.xlane.xlu0 %2062
    %v2064 = vsel %vm45, %v2060, 0.0
    %2065 = vadd.xlane.f32.xlu0 %v2064
    %v2066 = vpop.xlane.xlu0 %2065
    %v2067 = vmul.f32 %v2063, %v1826
    %v2068 = vmul.f32 %v2066, %v1826
    %v2069 = vadd.f32 %v2067, 1e-05
    %v2070 = vadd.f32 %v2068, 1e-05
    %v2071 = vrsqrt.pop %v2069
    %v2072 = vrsqrt.pop %v2070
    %v2073 = vmul.f32 %v2057, %v2071
    %v2074 = vmul.f32 %v2058, %v2072
    %v2075 = vlaneseq
    %v2076 = vshrl.u32 %v2075, 7
    %v2077 = vsub.s32 0, %v2076
    %v2078 = vrot.slane %v1816, %v2077
    %v2079 = vmul.f32 %v2073, %v2078
    %v2080 = vmul.f32 %v2074, %v2078
    %v2081 = vlaneseq
    %v2082 = vshrl.u32 %v2081, 7
    %v2083 = vsub.s32 0, %v2082
    %v2084 = vrot.slane %v1817, %v2083
    %v2085 = vadd.f32 %v2079, %v2084
    %v2086 = vadd.f32 %v2080, %v2084
    %2087 = vst.msk [vmem:[#allocation2] sm:$0xff] %vm45, %v2085
    %2088 = vst.msk [vmem:[#allocation2 + $0x8] sm:$0xff] %vm45, %v2086
    // Predicated region
    $region34: #{tpu_custom_call.1} parent=1 // pred_check
      _
    $region35: #{tpu_custom_call.1} parent=1 // pred_check_branch
      %2090 = sbr.rel (0) target = $region37
    $region36: #{tpu_custom_call.1} parent=1 // pred_region
      %s2092 = ssub.s32 256, 256
      %2093 = vsyncadd [#allocation3], %s2092
      %s2094 = sshll.u32 [#allocation2], 4
      %s2095 = int_to_ptr.vmem [resolvable:$true] %s2094
      %2100 = dma.vmem_to_hbm [thread:$0]  %s2095, 256, %s8, [#allocation3], 128, 128, 8
    $region37: #{tpu_custom_call.1} parent=1 // pred_fallthru
      _
    // Predicated region
    $region38: #{tpu_custom_call.1} parent=1 // pred_check
      _
    $region39: #{tpu_custom_call.1} parent=1 // pred_check_branch
      %2102 = sbr.rel (0) target = $region41
    $region40: #{tpu_custom_call.1} parent=1 // pred_region
      %2103 = dma.done [#allocation3], 256
    $region41: #{tpu_custom_call.1} parent=1 // pred_fallthru
      _
    %2104 = vsyncpa [#allocation3], 1

</llo_original>
